<compile_context>
chip_gen: v7x
topology: tpu7x:2x2x1
jax: 0.10.0
libtpu: 0.0.40
codegen_flags: <defaults>
</compile_context>

<pallas_src>
import functools

import jax
import jax.numpy as jnp
from jax.experimental import pallas as pl
from jax.experimental.pallas import tpu as pltpu

_SUBLANE = 16  # bf16 sublane packing


# ----------------------------------------------------------------------------
# Pallas kernel: tiled matmul with fused bias / ReLU / residual / LayerNorm.
#   y = LN(act(x @ w + b) + res)      (each piece optional)
# Grid = (M/tm, N/tn, K/tk); f32 accumulator lives in VMEM scratch.
# ----------------------------------------------------------------------------
def _linear_kernel(*refs, has_bias, has_residual, has_ln, apply_relu, ln_eps):
    it = iter(refs)
    x_ref = next(it)
    w_ref = next(it)
    b_ref = next(it) if has_bias else None
    r_ref = next(it) if has_residual else None
    g_ref = next(it) if has_ln else None
    be_ref = next(it) if has_ln else None
    o_ref = next(it)
    acc_ref = next(it)

    k = pl.program_id(2)

    @pl.when(k == 0)
    def _init():
        acc_ref[...] = jnp.zeros_like(acc_ref)

    x = x_ref[...]
    if x.dtype != jnp.bfloat16:
        x = x.astype(jnp.bfloat16)        # feed the MXU bf16
    acc_ref[...] += jnp.dot(x, w_ref[...], preferred_element_type=jnp.float32)

    # Epilogue only on the last K step: bias, ReLU, residual, LayerNorm, cast.
    @pl.when(k == pl.num_programs(2) - 1)
    def _epilogue():
        out = acc_ref[...]
        if has_bias:
            out = out + b_ref[...].astype(jnp.float32)
        if apply_relu:
            out = jnp.maximum(out, 0.0)
        if has_residual:
            out = out + r_ref[...].astype(jnp.float32)
        if has_ln:
            mu = jnp.mean(out, axis=-1, keepdims=True)
            var = jnp.mean(jnp.square(out - mu), axis=-1, keepdims=True)
            out = (out - mu) * jax.lax.rsqrt(var + ln_eps)
            out = out * g_ref[...].astype(jnp.float32) + be_ref[...].astype(jnp.float32)
        o_ref[...] = out.astype(o_ref.dtype)


def _pick_tile(dim, preferred, align, prefer_multi=False):
    """Largest aligned tile <= preferred dividing dim; prefer >=2 blocks when
    prefer_multi (dual-TC occupancy); fall back to the full dim (exempt)."""
    if prefer_multi and dim >= 2 * align:
        half = (dim // 2) // align * align
        preferred = min(preferred, max(half, align))
    if dim <= preferred:
        return dim
    t = (preferred // align) * align
    while t >= align:
        if dim % t == 0:
            return t
        t -= align
    return dim


def fused_linear(x2d, w_t, bias=None, residual=None, ln=None, relu=False,
                 out_dtype=None, tm=512, tn=512, tk=512, ln_eps=1e-5):
    """x2d: (M, K); w_t: (K, N) bf16 pre-transposed; bias: (N,);
    residual: (M, N); ln: (gamma, beta) each (N,)."""
    M0, K = x2d.shape
    K2, N = w_t.shape
    assert K == K2
    out_dtype = out_dtype if out_dtype is not None else x2d.dtype

    # Pad awkward M = B*S up to a sublane multiple so tiles stay aligned.
    pad = (-M0) % _SUBLANE
    if pad:
        x2d = jnp.pad(x2d, ((0, pad), (0, 0)))
        if residual is not None:
            residual = jnp.pad(residual, ((0, pad), (0, 0)))
    M = M0 + pad

    tm = _pick_tile(M, tm, _SUBLANE, prefer_multi=True)
    tn = N if ln is not None else _pick_tile(N, tn, 128)  # LN needs full rows
    tk = _pick_tile(K, tk, 128)
    grid = (M // tm, N // tn, K // tk)

    has_bias = bias is not None
    has_res = residual is not None
    has_ln = ln is not None

    in_specs = [
        pl.BlockSpec((tm, tk), lambda i, j, k: (i, k)),   # x tile
        pl.BlockSpec((tk, tn), lambda i, j, k: (k, j)),   # w tile (bf16)
    ]
    args = [x2d, w_t]
    if has_bias:
        in_specs.append(pl.BlockSpec((1, tn), lambda i, j, k: (0, j)))
        args.append(bias.reshape(1, N).astype(jnp.float32))
    if has_res:
        in_specs.append(pl.BlockSpec((tm, tn), lambda i, j, k: (i, j)))
        args.append(residual)
    if has_ln:
        gamma, beta = ln
        in_specs.append(pl.BlockSpec((1, tn), lambda i, j, k: (0, j)))
        in_specs.append(pl.BlockSpec((1, tn), lambda i, j, k: (0, j)))
        args.append(gamma.reshape(1, N).astype(jnp.float32))
        args.append(beta.reshape(1, N).astype(jnp.float32))

    kernel = functools.partial(
        _linear_kernel, has_bias=has_bias, has_residual=has_res,
        has_ln=has_ln, apply_relu=relu, ln_eps=ln_eps)

    flops = 2 * M * N * K
    bytes_accessed = (4 * M * K + 2 * K * N + 4 * M * N
                      + (4 * N if has_bias else 0)
                      + (4 * M * N if has_res else 0)
                      + (8 * N if has_ln else 0))

    out = pl.pallas_call(
        kernel,
        out_shape=jax.ShapeDtypeStruct((M, N), out_dtype),
        grid_spec=pltpu.PrefetchScalarGridSpec(
            num_scalar_prefetch=0,
            grid=grid,
            in_specs=in_specs,
            out_specs=pl.BlockSpec((tm, tn), lambda i, j, k: (i, j)),
            scratch_shapes=[pltpu.VMEM((tm, tn), jnp.float32)],
        ),
        compiler_params=pltpu.CompilerParams(
            dimension_semantics=("parallel", "parallel", "arbitrary"),
            vmem_limit_bytes=48 * 1024 * 1024,
        ),
        cost_estimate=pl.CostEstimate(
            flops=flops, transcendentals=0, bytes_accessed=bytes_accessed),
    )(*args)
    return out[:M0] if pad else out


# ----------------------------------------------------------------------------
# Flash-attention-style Pallas kernel (online softmax).  q/k/v: (B*H, S, hd),
# 1/sqrt(hd) already folded into q.  Softmax math stays in f32.
# ----------------------------------------------------------------------------
def _flash_attn_kernel(q_ref, k_ref, v_ref, o_ref, m_sc, l_sc, acc_sc):
    ki = pl.program_id(2)

    @pl.when(ki == 0)
    def _():
        m_sc[...] = jnp.full_like(m_sc, -jnp.inf)
        l_sc[...] = jnp.zeros_like(l_sc)
        acc_sc[...] = jnp.zeros_like(acc_sc)

    s = jnp.einsum("bqd,bkd->bqk", q_ref[...], k_ref[...],
                   preferred_element_type=jnp.float32)
    m_prev = m_sc[...]
    m_new = jnp.maximum(m_prev, s.max(axis=-1, keepdims=True))
    alpha = jnp.exp(m_prev - m_new)
    p = jnp.exp(s - m_new)
    l_sc[...] = alpha * l_sc[...] + p.sum(axis=-1, keepdims=True)
    acc_sc[...] = alpha * acc_sc[...] + jnp.einsum(
        "bqk,bkd->bqd", p.astype(v_ref.dtype), v_ref[...],
        preferred_element_type=jnp.float32)
    m_sc[...] = m_new

    @pl.when(ki == pl.num_programs(2) - 1)
    def _():
        o_ref[...] = (acc_sc[...] * pl.reciprocal(l_sc[...], approx=True)
                      ).astype(o_ref.dtype)


def flash_attention(q, k, v, *, tq=128, tkv=128):
    BH, S, hd = q.shape
    tq = _pick_tile(S, tq, 8)
    tkv = _pick_tile(S, tkv, 8)
    grid = (BH, S // tq, S // tkv)
    return pl.pallas_call(
        _flash_attn_kernel,
        out_shape=jax.ShapeDtypeStruct((BH, S, hd), q.dtype),
        grid_spec=pltpu.PrefetchScalarGridSpec(
            num_scalar_prefetch=0,
            grid=grid,
            in_specs=[
                pl.BlockSpec((1, tq, hd), lambda b, qi, ki: (b, qi, 0)),
                pl.BlockSpec((1, tkv, hd), lambda b, qi, ki: (b, ki, 0)),
                pl.BlockSpec((1, tkv, hd), lambda b, qi, ki: (b, ki, 0)),
            ],
            out_specs=pl.BlockSpec((1, tq, hd), lambda b, qi, ki: (b, qi, 0)),
            scratch_shapes=[
                pltpu.VMEM((1, tq, 1), jnp.float32),
                pltpu.VMEM((1, tq, 1), jnp.float32),
                pltpu.VMEM((1, tq, hd), jnp.float32),
            ],
        ),
        compiler_params=pltpu.CompilerParams(
            dimension_semantics=("parallel", "parallel", "arbitrary"),
            vmem_limit_bytes=48 * 1024 * 1024,
        ),
        cost_estimate=pl.CostEstimate(
            flops=4 * BH * S * S * hd,
            transcendentals=BH * S * S,
            bytes_accessed=2 * 4 * BH * S * hd,
        ),
    )(q, k, v)


# ----------------------------------------------------------------------------
# TransformerBlock.forward equivalent (post-LN, eval mode: dropout = identity)
# ----------------------------------------------------------------------------
@functools.partial(jax.jit, static_argnames=("num_heads",))
def transformer_block_forward(x, pp, mask=None, *, num_heads):
    B, S, D = x.shape
    H = num_heads
    hd = D // H
    M = B * S
    xf = x.reshape(M, D)

    # Fused QKV GEMM (Q pre-scaled by 1/sqrt(hd)); bf16 output feeds attention.
    qkv = fused_linear(xf, pp["w_qkv"], out_dtype=jnp.bfloat16)      # (M, 3D)
    qkv = qkv.reshape(B, S, 3, H, hd)
    q = qkv[:, :, 0].transpose(0, 2, 1, 3).reshape(B * H, S, hd)
    k = qkv[:, :, 1].transpose(0, 2, 1, 3).reshape(B * H, S, hd)
    v = qkv[:, :, 2].transpose(0, 2, 1, 3).reshape(B * H, S, hd)

    if mask is None:
        ctx = flash_attention(q, k, v)                               # (BH, S, hd)
    else:
        # TODO(synk): masked attention falls back to XLA; fold the mask into
        # the flash kernel for production masked use (keep math in f32).
        scores = jnp.einsum("bqd,bkd->bqk", q.astype(jnp.float32),
                            k.astype(jnp.float32)).reshape(B, H, S, S)
        scores = jnp.where(mask == 0, jnp.float32(-1e20), scores)
        attn = jax.nn.softmax(scores, axis=-1)
        ctx = jnp.einsum("bhqk,bhkd->bhqd", attn,
                         v.reshape(B, H, S, hd).astype(jnp.float32))
        ctx = ctx.reshape(B * H, S, hd).astype(jnp.bfloat16)

    ctx = ctx.reshape(B, H, S, hd).transpose(0, 2, 1, 3).reshape(M, D)

    # TODO(synk): nn.Dropout is identity in eval mode (not implemented).
    # Wc projection + residual + LayerNorm1 fused into one GEMM epilogue.
    x1 = fused_linear(ctx, pp["w_c"], residual=xf,
                      ln=(pp["ln1_g"], pp["ln1_b"]), out_dtype=jnp.float32)
    # FFN: W1 + bias + ReLU fused (bf16 hidden); W2 + bias + residual + LN2 fused.
    h = fused_linear(x1, pp["w_1"], bias=pp["b_1"], relu=True,
                     out_dtype=jnp.bfloat16)
    out = fused_linear(h, pp["w_2"], bias=pp["b_2"], residual=x1,
                       ln=(pp["ln2_g"], pp["ln2_b"]), out_dtype=jnp.float32)
    return out.reshape(B, S, D)


# ----------------------------------------------------------------------------
# Parameters (PyTorch layout) + pre-transposed / fused / bf16 Pallas layout
# ----------------------------------------------------------------------------
def init_params(key, d, m):
    ks = jax.random.split(key, 8)
    w = lambda k, shape, s=0.08: (s * jax.random.normal(k, shape)).astype(jnp.float32)
    return {
        # nn.Linear weights are (out, in); attention projections have no bias.
        "wq": w(ks[0], (d, d)), "wk": w(ks[1], (d, d)),
        "wv": w(ks[2], (d, d)), "wc": w(ks[3], (d, d)),
        "W1": w(ks[4], (m, d)), "b1": w(ks[5], (m,), 0.02),
        "W2": w(ks[6], (d, m)), "b2": w(ks[7], (d,), 0.02),
        "ln1_g": jnp.ones((d,), jnp.float32), "ln1_b": jnp.zeros((d,), jnp.float32),
        "ln2_g": jnp.ones((d,), jnp.float32), "ln2_b": jnp.zeros((d,), jnp.float32),
    }


def prepare_pallas_params(p, num_heads):
    d = p["wq"].shape[0]
    hd = d // num_heads
    scale = 1.0 / jnp.sqrt(jnp.float32(hd))
    # (D, 3D) fused QKV weight; 1/sqrt(hd) folded into the Q columns; bf16.
    w_qkv = jnp.concatenate([p["wq"].T * scale, p["wk"].T, p["wv"].T], axis=1)
    return {
        "w_qkv": w_qkv.astype(jnp.bfloat16),
        "w_c": p["wc"].T.astype(jnp.bfloat16),
        "w_1": p["W1"].T.astype(jnp.bfloat16), "b_1": p["b1"],
        "w_2": p["W2"].T.astype(jnp.bfloat16), "b_2": p["b2"],
        "ln1_g": p["ln1_g"], "ln1_b": p["ln1_b"],
        "ln2_g": p["ln2_g"], "ln2_b": p["ln2_b"],
    }


# ----------------------------------------------------------------------------
# Pure-JAX f32 reference mirroring the PyTorch module exactly
# ----------------------------------------------------------------------------
def _layer_norm(x, gamma, beta, eps=1e-5):
    mu = jnp.mean(x, axis=-1, keepdims=True)
    var = jnp.mean(jnp.square(x - mu), axis=-1, keepdims=True)
    return (x - mu) * jax.lax.rsqrt(var + eps) * gamma + beta


def reference_forward(x, p, mask, num_heads):
    B, S, D = x.shape
    H = num_heads
    hd = D // H
    lin = lambda t, w, b=None: (t @ w.T + b) if b is not None else t @ w.T
    q = lin(x, p["wq"]).reshape(B, S, H, hd).transpose(0, 2, 1, 3)
    k = lin(x, p["wk"]).reshape(B, S, H, hd).transpose(0, 2, 1, 3)
    v = lin(x, p["wv"]).reshape(B, S, H, hd).transpose(0, 2, 1, 3)
    scores = jnp.einsum("bhqd,bhkd->bhqk", q, k) / jnp.sqrt(jnp.float32(hd))
    if mask is not None:
        scores = jnp.where(mask == 0, jnp.float32(-1e20), scores)
    attn = jax.nn.softmax(scores, axis=-1)
    out = jnp.einsum("bhqk,bhkd->bhqd", attn, v).transpose(0, 2, 1, 3).reshape(B, S, D)
    x = _layer_norm(x + lin(out, p["wc"]), p["ln1_g"], p["ln1_b"])
    ff = jnp.maximum(lin(x, p["W1"], p["b1"]), 0.0)
    ff = lin(ff, p["W2"], p["b2"])
    return _layer_norm(x + ff, p["ln2_g"], p["ln2_b"])


if __name__ == "__main__":
    B, S, D, H, M_FF = 2, 8, 32, 4, 128

    key = jax.random.PRNGKey(0)
    kx, kp = jax.random.split(key)
    x = jax.random.normal(kx, (B, S, D), dtype=jnp.float32)
    params = init_params(kp, D, M_FF)
    pp = prepare_pallas_params(params, H)

    out = transformer_block_forward(x, pp, None, num_heads=H)
    jax.block_until_ready(out)

    ref = reference_forward(x, params, None, H)
    assert out.shape == (B, S, D)
    err = float(jnp.max(jnp.abs(out - ref)))
    # bf16 MXU path vs pure-f32 reference: loose tolerance.
    assert jnp.allclose(out, ref, atol=3e-2, rtol=3e-2), f"max abs err {err}"

    print("KERNEL_OK")
</pallas_src>

<mosaic_0001>
module attributes {stable_mosaic.version = 11 : i64} {
  func.func @_linear_kernel(%arg0: i32, %arg1: i32, %arg2: i32, %arg3: memref<16x32xf32, #tpu.memory_space<vmem>>, %arg4: memref<32x96xbf16, #tpu.memory_space<vmem>>, %arg5: memref<16x96xbf16, #tpu.memory_space<vmem>>, %arg6: memref<16x96xf32, #tpu.memory_space<vmem>>) attributes {dimension_semantics = [#tpu.dimension_semantics<parallel>, #tpu.dimension_semantics<parallel>, #tpu.dimension_semantics<arbitrary>], iteration_bounds = array<i64: 1, 1, 1>, scalar_prefetch = 0 : i64, scratch_operands = 1 : i64, tpu.core_type = #tpu.core_type<tc>, window_params = [{transform_indices = @transform_0, window_bounds = array<i64: 16, 32>}, {transform_indices = @transform_1, window_bounds = array<i64: 32, 96>}, {transform_indices = @transform_2, window_bounds = array<i64: 16, 96>}]} {
    %c0_i32 = arith.constant 0 : i32
    %0 = arith.cmpi eq, %arg2, %c0_i32 : i32
    %1 = arith.extui %0 : i1 to i32
    %c0_i32_0 = arith.constant 0 : i32
    %2 = arith.cmpi ne, %1, %c0_i32_0 : i32
    scf.if %2 {
      %cst_10 = arith.constant 0.000000e+00 : f32
      %13 = vector.broadcast %cst_10 : f32 to vector<16x96xf32>
      %c0_11 = arith.constant 0 : index
      %c0_12 = arith.constant 0 : index
      %14 = vector.load %arg6[%c0_11, %c0_12] : memref<16x96xf32, #tpu.memory_space<vmem>>, vector<16x96xf32>
      tpu.vector_store %arg6[%c0_11, %c0_12], %13 {strides = array<i32>} : memref<16x96xf32, #tpu.memory_space<vmem>>, vector<16x96xf32>,
    } else {
    }
    %c0 = arith.constant 0 : index
    %c0_1 = arith.constant 0 : index
    %3 = vector.load %arg3[%c0, %c0_1] : memref<16x32xf32, #tpu.memory_space<vmem>>, vector<16x32xf32>
    %4 = arith.truncf %3 : vector<16x32xf32> to vector<16x32xbf16>
    %c0_2 = arith.constant 0 : index
    %c0_3 = arith.constant 0 : index
    %5 = vector.load %arg6[%c0_2, %c0_3] : memref<16x96xf32, #tpu.memory_space<vmem>>, vector<16x96xf32>
    %c0_4 = arith.constant 0 : index
    %c0_5 = arith.constant 0 : index
    %6 = vector.load %arg4[%c0_4, %c0_5] : memref<32x96xbf16, #tpu.memory_space<vmem>>, vector<32x96xbf16>
    %cst = arith.constant dense<0.000000e+00> : vector<16x96xf32>
    %7 = tpu.matmul %4, %6, %cst {dimension_numbers = #tpu.dot_dimension_numbers<[1], [0], [0], [1], [0, 0, 1, 1], [], []>} : vector<16x32xbf16>, vector<32x96xbf16>, vector<16x96xf32> -> vector<16x96xf32>
    %8 = arith.addf %5, %7 : vector<16x96xf32>
    %c0_6 = arith.constant 0 : index
    %c0_7 = arith.constant 0 : index
    %9 = vector.load %arg6[%c0_6, %c0_7] : memref<16x96xf32, #tpu.memory_space<vmem>>, vector<16x96xf32>
    tpu.vector_store %arg6[%c0_6, %c0_7], %8 {strides = array<i32>} : memref<16x96xf32, #tpu.memory_space<vmem>>, vector<16x96xf32>,
    %c0_i32_8 = arith.constant 0 : i32
    %10 = arith.cmpi eq, %arg2, %c0_i32_8 : i32
    %11 = arith.extui %10 : i1 to i32
    %c0_i32_9 = arith.constant 0 : i32
    %12 = arith.cmpi ne, %11, %c0_i32_9 : i32
    scf.if %12 {
      %c0_10 = arith.constant 0 : index
      %c0_11 = arith.constant 0 : index
      %13 = vector.load %arg6[%c0_10, %c0_11] : memref<16x96xf32, #tpu.memory_space<vmem>>, vector<16x96xf32>
      %14 = arith.truncf %13 : vector<16x96xf32> to vector<16x96xbf16>
      %c0_12 = arith.constant 0 : index
      %c0_13 = arith.constant 0 : index
      %15 = vector.load %arg5[%c0_12, %c0_13] : memref<16x96xbf16, #tpu.memory_space<vmem>>, vector<16x96xbf16>
      tpu.vector_store %arg5[%c0_12, %c0_13], %14 {strides = array<i32>} : memref<16x96xbf16, #tpu.memory_space<vmem>>, vector<16x96xbf16>,
    } else {
    }
    return
  }
  func.func @transform_0(%arg0: i32, %arg1: i32, %arg2: i32) -> (i32, i32) {
    %c0_i32 = arith.constant 0 : i32
    return %arg0, %arg2 : i32, i32
  }
  func.func @transform_1(%arg0: i32, %arg1: i32, %arg2: i32) -> (i32, i32) {
    %c0_i32 = arith.constant 0 : i32
    return %arg2, %arg1 : i32, i32
  }
  func.func @transform_2(%arg0: i32, %arg1: i32, %arg2: i32) -> (i32, i32) {
    %c0_i32 = arith.constant 0 : i32
    return %arg0, %arg1 : i32, i32
  }
}

module attributes {stable_mosaic.version = 11 : i64} {
  func.func @_flash_attn_kernel(%arg0: i32, %arg1: i32, %arg2: i32, %arg3: memref<1x8x8xbf16, #tpu.memory_space<vmem>>, %arg4: memref<1x8x8xbf16, #tpu.memory_space<vmem>>, %arg5: memref<1x8x8xbf16, #tpu.memory_space<vmem>>, %arg6: memref<1x8x8xbf16, #tpu.memory_space<vmem>>, %arg7: memref<1x8x1xf32, #tpu.memory_space<vmem>>, %arg8: memref<1x8x1xf32, #tpu.memory_space<vmem>>, %arg9: memref<1x8x8xf32, #tpu.memory_space<vmem>>) attributes {dimension_semantics = [#tpu.dimension_semantics<parallel>, #tpu.dimension_semantics<parallel>, #tpu.dimension_semantics<arbitrary>], iteration_bounds = array<i64: 8, 1, 1>, scalar_prefetch = 0 : i64, scratch_operands = 3 : i64, tpu.core_type = #tpu.core_type<tc>, window_params = [{transform_indices = @transform_0, window_bounds = array<i64: 1, 8, 8>}, {transform_indices = @transform_1, window_bounds = array<i64: 1, 8, 8>}, {transform_indices = @transform_2, window_bounds = array<i64: 1, 8, 8>}, {transform_indices = @transform_3, window_bounds = array<i64: 1, 8, 8>}]} {
    %c0_i32 = arith.constant 0 : i32
    %0 = arith.cmpi eq, %arg2, %c0_i32 : i32
    %1 = arith.extui %0 : i1 to i32
    %c0_i32_0 = arith.constant 0 : i32
    %2 = arith.cmpi ne, %1, %c0_i32_0 : i32
    scf.if %2 {
      %cst_32 = arith.constant 0xFF800000 : f32
      %33 = vector.broadcast %cst_32 : f32 to vector<1x8x1xf32>
      %c0_33 = arith.constant 0 : index
      %c0_34 = arith.constant 0 : index
      %c0_35 = arith.constant 0 : index
      %34 = vector.load %arg7[%c0_33, %c0_34, %c0_35] : memref<1x8x1xf32, #tpu.memory_space<vmem>>, vector<1x8x1xf32>
      tpu.vector_store %arg7[%c0_33, %c0_34, %c0_35], %33 {strides = array<i32>} : memref<1x8x1xf32, #tpu.memory_space<vmem>>, vector<1x8x1xf32>,
      %cst_36 = arith.constant 0.000000e+00 : f32
      %35 = vector.broadcast %cst_36 : f32 to vector<1x8x1xf32>
      %c0_37 = arith.constant 0 : index
      %c0_38 = arith.constant 0 : index
      %c0_39 = arith.constant 0 : index
      %36 = vector.load %arg8[%c0_37, %c0_38, %c0_39] : memref<1x8x1xf32, #tpu.memory_space<vmem>>, vector<1x8x1xf32>
      tpu.vector_store %arg8[%c0_37, %c0_38, %c0_39], %35 {strides = array<i32>} : memref<1x8x1xf32, #tpu.memory_space<vmem>>, vector<1x8x1xf32>,
      %cst_40 = arith.constant 0.000000e+00 : f32
      %37 = vector.broadcast %cst_40 : f32 to vector<1x8x8xf32>
      %c0_41 = arith.constant 0 : index
      %c0_42 = arith.constant 0 : index
      %c0_43 = arith.constant 0 : index
      %38 = vector.load %arg9[%c0_41, %c0_42, %c0_43] : memref<1x8x8xf32, #tpu.memory_space<vmem>>, vector<1x8x8xf32>
      tpu.vector_store %arg9[%c0_41, %c0_42, %c0_43], %37 {strides = array<i32>} : memref<1x8x8xf32, #tpu.memory_space<vmem>>, vector<1x8x8xf32>,
    } else {
    }
    %c0 = arith.constant 0 : index
    %c0_1 = arith.constant 0 : index
    %c0_2 = arith.constant 0 : index
    %3 = vector.load %arg3[%c0, %c0_1, %c0_2] : memref<1x8x8xbf16, #tpu.memory_space<vmem>>, vector<1x8x8xbf16>
    %c0_3 = arith.constant 0 : index
    %c0_4 = arith.constant 0 : index
    %c0_5 = arith.constant 0 : index
    %4 = vector.load %arg4[%c0_3, %c0_4, %c0_5] : memref<1x8x8xbf16, #tpu.memory_space<vmem>>, vector<1x8x8xbf16>
    "tpu.trace_start"() <{level = 10 : i32, message = "bqd,bkd->bqk"}> : () -> ()
    %cst = arith.constant dense<0.000000e+00> : vector<1x8x8xf32>
    %5 = tpu.matmul %3, %4, %cst {dimension_numbers = #tpu.dot_dimension_numbers<[2], [2], [1], [1], [0, 0, 0, 1, 1, 1], [0], [0]>} : vector<1x8x8xbf16>, vector<1x8x8xbf16>, vector<1x8x8xf32> -> vector<1x8x8xf32>
    "tpu.trace_stop"() : () -> ()
    %c0_6 = arith.constant 0 : index
    %c0_7 = arith.constant 0 : index
    %c0_8 = arith.constant 0 : index
    %6 = vector.load %arg7[%c0_6, %c0_7, %c0_8] : memref<1x8x1xf32, #tpu.memory_space<vmem>>, vector<1x8x1xf32>
    %cst_9 = arith.constant dense<0xFF800000> : vector<1x8xf32>
    %7 = vector.multi_reduction <maximumf>, %5, %cst_9 [2] : vector<1x8x8xf32> to vector<1x8xf32>
    %8 = vector.shape_cast %7 : vector<1x8xf32> to vector<1x8x1xf32>
    %9 = arith.maximumf %6, %8 : vector<1x8x1xf32>
    %10 = arith.subf %6, %9 : vector<1x8x1xf32>
    %11 = math.exp %10 : vector<1x8x1xf32>
    %12 = vector.broadcast %9 : vector<1x8x1xf32> to vector<1x8x8xf32>
    %13 = arith.subf %5, %12 : vector<1x8x8xf32>
    %14 = math.exp %13 : vector<1x8x8xf32>
    %c0_10 = arith.constant 0 : index
    %c0_11 = arith.constant 0 : index
    %c0_12 = arith.constant 0 : index
    %15 = vector.load %arg8[%c0_10, %c0_11, %c0_12] : memref<1x8x1xf32, #tpu.memory_space<vmem>>, vector<1x8x1xf32>
    %16 = arith.mulf %11, %15 : vector<1x8x1xf32>
    %cst_13 = arith.constant dense<0.000000e+00> : vector<1x8xf32>
    %17 = vector.multi_reduction <add>, %14, %cst_13 [2] : vector<1x8x8xf32> to vector<1x8xf32>
    %18 = vector.shape_cast %17 : vector<1x8xf32> to vector<1x8x1xf32>
    %19 = arith.addf %16, %18 : vector<1x8x1xf32>
    %c0_14 = arith.constant 0 : index
    %c0_15 = arith.constant 0 : index
    %c0_16 = arith.constant 0 : index
    %20 = vector.load %arg8[%c0_14, %c0_15, %c0_16] : memref<1x8x1xf32, #tpu.memory_space<vmem>>, vector<1x8x1xf32>
    tpu.vector_store %arg8[%c0_14, %c0_15, %c0_16], %19 {strides = array<i32>} : memref<1x8x1xf32, #tpu.memory_space<vmem>>, vector<1x8x1xf32>,
    %c0_17 = arith.constant 0 : index
    %c0_18 = arith.constant 0 : index
    %c0_19 = arith.constant 0 : index
    %21 = vector.load %arg9[%c0_17, %c0_18, %c0_19] : memref<1x8x8xf32, #tpu.memory_space<vmem>>, vector<1x8x8xf32>
    %22 = vector.broadcast %11 : vector<1x8x1xf32> to vector<1x8x8xf32>
    %23 = arith.mulf %22, %21 : vector<1x8x8xf32>
    %24 = arith.truncf %14 : vector<1x8x8xf32> to vector<1x8x8xbf16>
    %c0_20 = arith.constant 0 : index
    %c0_21 = arith.constant 0 : index
    %c0_22 = arith.constant 0 : index
    %25 = vector.load %arg5[%c0_20, %c0_21, %c0_22] : memref<1x8x8xbf16, #tpu.memory_space<vmem>>, vector<1x8x8xbf16>
    "tpu.trace_start"() <{level = 10 : i32, message = "bqk,bkd->bqd"}> : () -> ()
    %cst_23 = arith.constant dense<0.000000e+00> : vector<1x8x8xf32>
    %26 = tpu.matmul %24, %25, %cst_23 {dimension_numbers = #tpu.dot_dimension_numbers<[2], [1], [1], [2], [0, 0, 0, 1, 1, 2], [0], [0]>} : vector<1x8x8xbf16>, vector<1x8x8xbf16>, vector<1x8x8xf32> -> vector<1x8x8xf32>
    "tpu.trace_stop"() : () -> ()
    %27 = arith.addf %23, %26 : vector<1x8x8xf32>
    %c0_24 = arith.constant 0 : index
    %c0_25 = arith.constant 0 : index
    %c0_26 = arith.constant 0 : index
    %28 = vector.load %arg9[%c0_24, %c0_25, %c0_26] : memref<1x8x8xf32, #tpu.memory_space<vmem>>, vector<1x8x8xf32>
    tpu.vector_store %arg9[%c0_24, %c0_25, %c0_26], %27 {strides = array<i32>} : memref<1x8x8xf32, #tpu.memory_space<vmem>>, vector<1x8x8xf32>,
    %c0_27 = arith.constant 0 : index
    %c0_28 = arith.constant 0 : index
    %c0_29 = arith.constant 0 : index
    %29 = vector.load %arg7[%c0_27, %c0_28, %c0_29] : memref<1x8x1xf32, #tpu.memory_space<vmem>>, vector<1x8x1xf32>
    tpu.vector_store %arg7[%c0_27, %c0_28, %c0_29], %9 {strides = array<i32>} : memref<1x8x1xf32, #tpu.memory_space<vmem>>, vector<1x8x1xf32>,
    %c0_i32_30 = arith.constant 0 : i32
    %30 = arith.cmpi eq, %arg2, %c0_i32_30 : i32
    %31 = arith.extui %30 : i1 to i32
    %c0_i32_31 = arith.constant 0 : i32
    %32 = arith.cmpi ne, %31, %c0_i32_31 : i32
    scf.if %32 {
      %c0_32 = arith.constant 0 : index
      %c0_33 = arith.constant 0 : index
      %c0_34 = arith.constant 0 : index
      %33 = vector.load %arg9[%c0_32, %c0_33, %c0_34] : memref<1x8x8xf32, #tpu.memory_space<vmem>>, vector<1x8x8xf32>
      %c0_35 = arith.constant 0 : index
      %c0_36 = arith.constant 0 : index
      %c0_37 = arith.constant 0 : index
      %34 = vector.load %arg8[%c0_35, %c0_36, %c0_37] : memref<1x8x1xf32, #tpu.memory_space<vmem>>, vector<1x8x1xf32>
      %35 = tpu.reciprocal %34 {approx = true} : vector<1x8x1xf32> -> vector<1x8x1xf32>
      %36 = vector.broadcast %35 : vector<1x8x1xf32> to vector<1x8x8xf32>
      %37 = arith.mulf %33, %36 : vector<1x8x8xf32>
      %38 = arith.truncf %37 : vector<1x8x8xf32> to vector<1x8x8xbf16>
      %c0_38 = arith.constant 0 : index
      %c0_39 = arith.constant 0 : index
      %c0_40 = arith.constant 0 : index
      %39 = vector.load %arg6[%c0_38, %c0_39, %c0_40] : memref<1x8x8xbf16, #tpu.memory_space<vmem>>, vector<1x8x8xbf16>
      tpu.vector_store %arg6[%c0_38, %c0_39, %c0_40], %38 {strides = array<i32>} : memref<1x8x8xbf16, #tpu.memory_space<vmem>>, vector<1x8x8xbf16>,
    } else {
    }
    return
  }
  func.func @transform_0(%arg0: i32, %arg1: i32, %arg2: i32) -> (i32, i32, i32) {
    %c0_i32 = arith.constant 0 : i32
    %c0_i32_0 = arith.constant 0 : i32
    return %arg0, %arg1, %c0_i32 : i32, i32, i32
  }
  func.func @transform_1(%arg0: i32, %arg1: i32, %arg2: i32) -> (i32, i32, i32) {
    %c0_i32 = arith.constant 0 : i32
    %c0_i32_0 = arith.constant 0 : i32
    return %arg0, %arg2, %c0_i32 : i32, i32, i32
  }
  func.func @transform_2(%arg0: i32, %arg1: i32, %arg2: i32) -> (i32, i32, i32) {
    %c0_i32 = arith.constant 0 : i32
    %c0_i32_0 = arith.constant 0 : i32
    return %arg0, %arg2, %c0_i32 : i32, i32, i32
  }
  func.func @transform_3(%arg0: i32, %arg1: i32, %arg2: i32) -> (i32, i32, i32) {
    %c0_i32 = arith.constant 0 : i32
    %c0_i32_0 = arith.constant 0 : i32
    return %arg0, %arg1, %c0_i32 : i32, i32, i32
  }
}

module attributes {stable_mosaic.version = 11 : i64} {
  func.func @_linear_kernel(%arg0: i32, %arg1: i32, %arg2: i32, %arg3: memref<16x32xbf16, #tpu.memory_space<vmem>>, %arg4: memref<32x32xbf16, #tpu.memory_space<vmem>>, %arg5: memref<16x32xf32, #tpu.memory_space<vmem>>, %arg6: memref<1x32xf32, #tpu.memory_space<vmem>>, %arg7: memref<1x32xf32, #tpu.memory_space<vmem>>, %arg8: memref<16x32xf32, #tpu.memory_space<vmem>>, %arg9: memref<16x32xf32, #tpu.memory_space<vmem>>) attributes {dimension_semantics = [#tpu.dimension_semantics<parallel>, #tpu.dimension_semantics<parallel>, #tpu.dimension_semantics<arbitrary>], iteration_bounds = array<i64: 1, 1, 1>, scalar_prefetch = 0 : i64, scratch_operands = 1 : i64, tpu.core_type = #tpu.core_type<tc>, window_params = [{transform_indices = @transform_0, window_bounds = array<i64: 16, 32>}, {transform_indices = @transform_1, window_bounds = array<i64: 32, 32>}, {transform_indices = @transform_2, window_bounds = array<i64: 16, 32>}, {transform_indices = @transform_3, window_bounds = array<i64: 1, 32>}, {transform_indices = @transform_4, window_bounds = array<i64: 1, 32>}, {transform_indices = @transform_5, window_bounds = array<i64: 16, 32>}]} {
    %c0_i32 = arith.constant 0 : i32
    %0 = arith.cmpi eq, %arg2, %c0_i32 : i32
    %1 = arith.extui %0 : i1 to i32
    %c0_i32_0 = arith.constant 0 : i32
    %2 = arith.cmpi ne, %1, %c0_i32_0 : i32
    scf.if %2 {
      %cst_10 = arith.constant 0.000000e+00 : f32
      %12 = vector.broadcast %cst_10 : f32 to vector<16x32xf32>
      %c0_11 = arith.constant 0 : index
      %c0_12 = arith.constant 0 : index
      %13 = vector.load %arg9[%c0_11, %c0_12] : memref<16x32xf32, #tpu.memory_space<vmem>>, vector<16x32xf32>
      tpu.vector_store %arg9[%c0_11, %c0_12], %12 {strides = array<i32>} : memref<16x32xf32, #tpu.memory_space<vmem>>, vector<16x32xf32>,
    } else {
    }
    %c0 = arith.constant 0 : index
    %c0_1 = arith.constant 0 : index
    %3 = vector.load %arg3[%c0, %c0_1] : memref<16x32xbf16, #tpu.memory_space<vmem>>, vector<16x32xbf16>
    %c0_2 = arith.constant 0 : index
    %c0_3 = arith.constant 0 : index
    %4 = vector.load %arg9[%c0_2, %c0_3] : memref<16x32xf32, #tpu.memory_space<vmem>>, vector<16x32xf32>
    %c0_4 = arith.constant 0 : index
    %c0_5 = arith.constant 0 : index
    %5 = vector.load %arg4[%c0_4, %c0_5] : memref<32x32xbf16, #tpu.memory_space<vmem>>, vector<32x32xbf16>
    %cst = arith.constant dense<0.000000e+00> : vector<16x32xf32>
    %6 = tpu.matmul %3, %5, %cst {dimension_numbers = #tpu.dot_dimension_numbers<[1], [0], [0], [1], [0, 0, 1, 1], [], []>} : vector<16x32xbf16>, vector<32x32xbf16>, vector<16x32xf32> -> vector<16x32xf32>
    %7 = arith.addf %4, %6 : vector<16x32xf32>
    %c0_6 = arith.constant 0 : index
    %c0_7 = arith.constant 0 : index
    %8 = vector.load %arg9[%c0_6, %c0_7] : memref<16x32xf32, #tpu.memory_space<vmem>>, vector<16x32xf32>
    tpu.vector_store %arg9[%c0_6, %c0_7], %7 {strides = array<i32>} : memref<16x32xf32, #tpu.memory_space<vmem>>, vector<16x32xf32>,
    %c0_i32_8 = arith.constant 0 : i32
    %9 = arith.cmpi eq, %arg2, %c0_i32_8 : i32
    %10 = arith.extui %9 : i1 to i32
    %c0_i32_9 = arith.constant 0 : i32
    %11 = arith.cmpi ne, %10, %c0_i32_9 : i32
    scf.if %11 {
      %c0_10 = arith.constant 0 : index
      %c0_11 = arith.constant 0 : index
      %12 = vector.load %arg9[%c0_10, %c0_11] : memref<16x32xf32, #tpu.memory_space<vmem>>, vector<16x32xf32>
      %c0_12 = arith.constant 0 : index
      %c0_13 = arith.constant 0 : index
      %13 = vector.load %arg5[%c0_12, %c0_13] : memref<16x32xf32, #tpu.memory_space<vmem>>, vector<16x32xf32>
      %14 = arith.addf %12, %13 : vector<16x32xf32>
      %cst_14 = arith.constant dense<0.000000e+00> : vector<16xf32>
      %15 = vector.multi_reduction <add>, %14, %cst_14 [1] : vector<16x32xf32> to vector<16xf32>
      %16 = vector.shape_cast %15 : vector<16xf32> to vector<16x1xf32>
      %cst_15 = arith.constant 3.200000e+01 : f32
      %17 = vector.broadcast %cst_15 : f32 to vector<16x1xf32>
      %18 = arith.divf %16, %17 : vector<16x1xf32>
      %19 = vector.broadcast %18 : vector<16x1xf32> to vector<16x32xf32>
      %20 = arith.subf %14, %19 : vector<16x32xf32>
      %21 = arith.mulf %20, %20 : vector<16x32xf32>
      %cst_16 = arith.constant dense<0.000000e+00> : vector<16xf32>
      %22 = vector.multi_reduction <add>, %21, %cst_16 [1] : vector<16x32xf32> to vector<16xf32>
      %23 = vector.shape_cast %22 : vector<16xf32> to vector<16x1xf32>
      %cst_17 = arith.constant 3.200000e+01 : f32
      %24 = vector.broadcast %cst_17 : f32 to vector<16x1xf32>
      %25 = arith.divf %23, %24 : vector<16x1xf32>
      %26 = vector.broadcast %18 : vector<16x1xf32> to vector<16x32xf32>
      %27 = arith.subf %14, %26 : vector<16x32xf32>
      %cst_18 = arith.constant 9.99999974E-6 : f32
      %28 = vector.broadcast %cst_18 : f32 to vector<16x1xf32>
      %29 = arith.addf %25, %28 : vector<16x1xf32>
      %30 = math.rsqrt %29 : vector<16x1xf32>
      %31 = vector.broadcast %30 : vector<16x1xf32> to vector<16x32xf32>
      %32 = arith.mulf %27, %31 : vector<16x32xf32>
      %c0_19 = arith.constant 0 : index
      %c0_20 = arith.constant 0 : index
      %33 = vector.load %arg6[%c0_19, %c0_20] : memref<1x32xf32, #tpu.memory_space<vmem>>, vector<1x32xf32>
      %34 = vector.broadcast %33 : vector<1x32xf32> to vector<16x32xf32>
      %35 = arith.mulf %32, %34 : vector<16x32xf32>
      %c0_21 = arith.constant 0 : index
      %c0_22 = arith.constant 0 : index
      %36 = vector.load %arg7[%c0_21, %c0_22] : memref<1x32xf32, #tpu.memory_space<vmem>>, vector<1x32xf32>
      %37 = vector.broadcast %36 : vector<1x32xf32> to vector<16x32xf32>
      %38 = arith.addf %35, %37 : vector<16x32xf32>
      %c0_23 = arith.constant 0 : index
      %c0_24 = arith.constant 0 : index
      %39 = vector.load %arg8[%c0_23, %c0_24] : memref<16x32xf32, #tpu.memory_space<vmem>>, vector<16x32xf32>
      tpu.vector_store %arg8[%c0_23, %c0_24], %38 {strides = array<i32>} : memref<16x32xf32, #tpu.memory_space<vmem>>, vector<16x32xf32>,
    } else {
    }
    return
  }
  func.func @transform_0(%arg0: i32, %arg1: i32, %arg2: i32) -> (i32, i32) {
    %c0_i32 = arith.constant 0 : i32
    return %arg0, %arg2 : i32, i32
  }
  func.func @transform_1(%arg0: i32, %arg1: i32, %arg2: i32) -> (i32, i32) {
    %c0_i32 = arith.constant 0 : i32
    return %arg2, %arg1 : i32, i32
  }
  func.func @transform_2(%arg0: i32, %arg1: i32, %arg2: i32) -> (i32, i32) {
    %c0_i32 = arith.constant 0 : i32
    return %arg0, %arg1 : i32, i32
  }
  func.func @transform_3(%arg0: i32, %arg1: i32, %arg2: i32) -> (i32, i32) {
    %c0_i32 = arith.constant 0 : i32
    %c0_i32_0 = arith.constant 0 : i32
    return %c0_i32, %arg1 : i32, i32
  }
  func.func @transform_4(%arg0: i32, %arg1: i32, %arg2: i32) -> (i32, i32) {
    %c0_i32 = arith.constant 0 : i32
    %c0_i32_0 = arith.constant 0 : i32
    return %c0_i32, %arg1 : i32, i32
  }
  func.func @transform_5(%arg0: i32, %arg1: i32, %arg2: i32) -> (i32, i32) {
    %c0_i32 = arith.constant 0 : i32
    return %arg0, %arg1 : i32, i32
  }
}

module attributes {stable_mosaic.version = 11 : i64} {
  func.func @_linear_kernel(%arg0: i32, %arg1: i32, %arg2: i32, %arg3: memref<16x32xf32, #tpu.memory_space<vmem>>, %arg4: memref<32x128xbf16, #tpu.memory_space<vmem>>, %arg5: memref<1x128xf32, #tpu.memory_space<vmem>>, %arg6: memref<16x128xbf16, #tpu.memory_space<vmem>>, %arg7: memref<16x128xf32, #tpu.memory_space<vmem>>) attributes {dimension_semantics = [#tpu.dimension_semantics<parallel>, #tpu.dimension_semantics<parallel>, #tpu.dimension_semantics<arbitrary>], iteration_bounds = array<i64: 1, 1, 1>, scalar_prefetch = 0 : i64, scratch_operands = 1 : i64, tpu.core_type = #tpu.core_type<tc>, window_params = [{transform_indices = @transform_0, window_bounds = array<i64: 16, 32>}, {transform_indices = @transform_1, window_bounds = array<i64: 32, 128>}, {transform_indices = @transform_2, window_bounds = array<i64: 1, 128>}, {transform_indices = @transform_3, window_bounds = array<i64: 16, 128>}]} {
    %c0_i32 = arith.constant 0 : i32
    %0 = arith.cmpi eq, %arg2, %c0_i32 : i32
    %1 = arith.extui %0 : i1 to i32
    %c0_i32_0 = arith.constant 0 : i32
    %2 = arith.cmpi ne, %1, %c0_i32_0 : i32
    scf.if %2 {
      %cst_10 = arith.constant 0.000000e+00 : f32
      %13 = vector.broadcast %cst_10 : f32 to vector<16x128xf32>
      %c0_11 = arith.constant 0 : index
      %c0_12 = arith.constant 0 : index
      %14 = vector.load %arg7[%c0_11, %c0_12] : memref<16x128xf32, #tpu.memory_space<vmem>>, vector<16x128xf32>
      tpu.vector_store %arg7[%c0_11, %c0_12], %13 {strides = array<i32>} : memref<16x128xf32, #tpu.memory_space<vmem>>, vector<16x128xf32>,
    } else {
    }
    %c0 = arith.constant 0 : index
    %c0_1 = arith.constant 0 : index
    %3 = vector.load %arg3[%c0, %c0_1] : memref<16x32xf32, #tpu.memory_space<vmem>>, vector<16x32xf32>
    %4 = arith.truncf %3 : vector<16x32xf32> to vector<16x32xbf16>
    %c0_2 = arith.constant 0 : index
    %c0_3 = arith.constant 0 : index
    %5 = vector.load %arg7[%c0_2, %c0_3] : memref<16x128xf32, #tpu.memory_space<vmem>>, vector<16x128xf32>
    %c0_4 = arith.constant 0 : index
    %c0_5 = arith.constant 0 : index
    %6 = vector.load %arg4[%c0_4, %c0_5] : memref<32x128xbf16, #tpu.memory_space<vmem>>, vector<32x128xbf16>
    %cst = arith.constant dense<0.000000e+00> : vector<16x128xf32>
    %7 = tpu.matmul %4, %6, %cst {dimension_numbers = #tpu.dot_dimension_numbers<[1], [0], [0], [1], [0, 0, 1, 1], [], []>} : vector<16x32xbf16>, vector<32x128xbf16>, vector<16x128xf32> -> vector<16x128xf32>
    %8 = arith.addf %5, %7 : vector<16x128xf32>
    %c0_6 = arith.constant 0 : index
    %c0_7 = arith.constant 0 : index
    %9 = vector.load %arg7[%c0_6, %c0_7] : memref<16x128xf32, #tpu.memory_space<vmem>>, vector<16x128xf32>
    tpu.vector_store %arg7[%c0_6, %c0_7], %8 {strides = array<i32>} : memref<16x128xf32, #tpu.memory_space<vmem>>, vector<16x128xf32>,
    %c0_i32_8 = arith.constant 0 : i32
    %10 = arith.cmpi eq, %arg2, %c0_i32_8 : i32
    %11 = arith.extui %10 : i1 to i32
    %c0_i32_9 = arith.constant 0 : i32
    %12 = arith.cmpi ne, %11, %c0_i32_9 : i32
    scf.if %12 {
      %c0_10 = arith.constant 0 : index
      %c0_11 = arith.constant 0 : index
      %13 = vector.load %arg7[%c0_10, %c0_11] : memref<16x128xf32, #tpu.memory_space<vmem>>, vector<16x128xf32>
      %c0_12 = arith.constant 0 : index
      %c0_13 = arith.constant 0 : index
      %14 = vector.load %arg5[%c0_12, %c0_13] : memref<1x128xf32, #tpu.memory_space<vmem>>, vector<1x128xf32>
      %15 = vector.broadcast %14 : vector<1x128xf32> to vector<16x128xf32>
      %16 = arith.addf %13, %15 : vector<16x128xf32>
      %cst_14 = arith.constant 0.000000e+00 : f32
      %17 = vector.broadcast %cst_14 : f32 to vector<16x128xf32>
      %18 = arith.maximumf %16, %17 : vector<16x128xf32>
      %19 = arith.truncf %18 : vector<16x128xf32> to vector<16x128xbf16>
      %c0_15 = arith.constant 0 : index
      %c0_16 = arith.constant 0 : index
      %20 = vector.load %arg6[%c0_15, %c0_16] : memref<16x128xbf16, #tpu.memory_space<vmem>>, vector<16x128xbf16>
      tpu.vector_store %arg6[%c0_15, %c0_16], %19 {strides = array<i32>} : memref<16x128xbf16, #tpu.memory_space<vmem>>, vector<16x128xbf16>,
    } else {
    }
    return
  }
  func.func @transform_0(%arg0: i32, %arg1: i32, %arg2: i32) -> (i32, i32) {
    %c0_i32 = arith.constant 0 : i32
    return %arg0, %arg2 : i32, i32
  }
  func.func @transform_1(%arg0: i32, %arg1: i32, %arg2: i32) -> (i32, i32) {
    %c0_i32 = arith.constant 0 : i32
    return %arg2, %arg1 : i32, i32
  }
  func.func @transform_2(%arg0: i32, %arg1: i32, %arg2: i32) -> (i32, i32) {
    %c0_i32 = arith.constant 0 : i32
    %c0_i32_0 = arith.constant 0 : i32
    return %c0_i32, %arg1 : i32, i32
  }
  func.func @transform_3(%arg0: i32, %arg1: i32, %arg2: i32) -> (i32, i32) {
    %c0_i32 = arith.constant 0 : i32
    return %arg0, %arg1 : i32, i32
  }
}

module attributes {stable_mosaic.version = 11 : i64} {
  func.func @_linear_kernel(%arg0: i32, %arg1: i32, %arg2: i32, %arg3: memref<16x128xbf16, #tpu.memory_space<vmem>>, %arg4: memref<128x32xbf16, #tpu.memory_space<vmem>>, %arg5: memref<1x32xf32, #tpu.memory_space<vmem>>, %arg6: memref<16x32xf32, #tpu.memory_space<vmem>>, %arg7: memref<1x32xf32, #tpu.memory_space<vmem>>, %arg8: memref<1x32xf32, #tpu.memory_space<vmem>>, %arg9: memref<16x32xf32, #tpu.memory_space<vmem>>, %arg10: memref<16x32xf32, #tpu.memory_space<vmem>>) attributes {dimension_semantics = [#tpu.dimension_semantics<parallel>, #tpu.dimension_semantics<parallel>, #tpu.dimension_semantics<arbitrary>], iteration_bounds = array<i64: 1, 1, 1>, scalar_prefetch = 0 : i64, scratch_operands = 1 : i64, tpu.core_type = #tpu.core_type<tc>, window_params = [{transform_indices = @transform_0, window_bounds = array<i64: 16, 128>}, {transform_indices = @transform_1, window_bounds = array<i64: 128, 32>}, {transform_indices = @transform_2, window_bounds = array<i64: 1, 32>}, {transform_indices = @transform_3, window_bounds = array<i64: 16, 32>}, {transform_indices = @transform_4, window_bounds = array<i64: 1, 32>}, {transform_indices = @transform_5, window_bounds = array<i64: 1, 32>}, {transform_indices = @transform_6, window_bounds = array<i64: 16, 32>}]} {
    %c0_i32 = arith.constant 0 : i32
    %0 = arith.cmpi eq, %arg2, %c0_i32 : i32
    %1 = arith.extui %0 : i1 to i32
    %c0_i32_0 = arith.constant 0 : i32
    %2 = arith.cmpi ne, %1, %c0_i32_0 : i32
    scf.if %2 {
      %cst_10 = arith.constant 0.000000e+00 : f32
      %12 = vector.broadcast %cst_10 : f32 to vector<16x32xf32>
      %c0_11 = arith.constant 0 : index
      %c0_12 = arith.constant 0 : index
      %13 = vector.load %arg10[%c0_11, %c0_12] : memref<16x32xf32, #tpu.memory_space<vmem>>, vector<16x32xf32>
      tpu.vector_store %arg10[%c0_11, %c0_12], %12 {strides = array<i32>} : memref<16x32xf32, #tpu.memory_space<vmem>>, vector<16x32xf32>,
    } else {
    }
    %c0 = arith.constant 0 : index
    %c0_1 = arith.constant 0 : index
    %3 = vector.load %arg3[%c0, %c0_1] : memref<16x128xbf16, #tpu.memory_space<vmem>>, vector<16x128xbf16>
    %c0_2 = arith.constant 0 : index
    %c0_3 = arith.constant 0 : index
    %4 = vector.load %arg10[%c0_2, %c0_3] : memref<16x32xf32, #tpu.memory_space<vmem>>, vector<16x32xf32>
    %c0_4 = arith.constant 0 : index
    %c0_5 = arith.constant 0 : index
    %5 = vector.load %arg4[%c0_4, %c0_5] : memref<128x32xbf16, #tpu.memory_space<vmem>>, vector<128x32xbf16>
    %cst = arith.constant dense<0.000000e+00> : vector<16x32xf32>
    %6 = tpu.matmul %3, %5, %cst {dimension_numbers = #tpu.dot_dimension_numbers<[1], [0], [0], [1], [0, 0, 1, 1], [], []>} : vector<16x128xbf16>, vector<128x32xbf16>, vector<16x32xf32> -> vector<16x32xf32>
    %7 = arith.addf %4, %6 : vector<16x32xf32>
    %c0_6 = arith.constant 0 : index
    %c0_7 = arith.constant 0 : index
    %8 = vector.load %arg10[%c0_6, %c0_7] : memref<16x32xf32, #tpu.memory_space<vmem>>, vector<16x32xf32>
    tpu.vector_store %arg10[%c0_6, %c0_7], %7 {strides = array<i32>} : memref<16x32xf32, #tpu.memory_space<vmem>>, vector<16x32xf32>,
    %c0_i32_8 = arith.constant 0 : i32
    %9 = arith.cmpi eq, %arg2, %c0_i32_8 : i32
    %10 = arith.extui %9 : i1 to i32
    %c0_i32_9 = arith.constant 0 : i32
    %11 = arith.cmpi ne, %10, %c0_i32_9 : i32
    scf.if %11 {
      %c0_10 = arith.constant 0 : index
      %c0_11 = arith.constant 0 : index
      %12 = vector.load %arg10[%c0_10, %c0_11] : memref<16x32xf32, #tpu.memory_space<vmem>>, vector<16x32xf32>
      %c0_12 = arith.constant 0 : index
      %c0_13 = arith.constant 0 : index
      %13 = vector.load %arg5[%c0_12, %c0_13] : memref<1x32xf32, #tpu.memory_space<vmem>>, vector<1x32xf32>
      %14 = vector.broadcast %13 : vector<1x32xf32> to vector<16x32xf32>
      %15 = arith.addf %12, %14 : vector<16x32xf32>
      %c0_14 = arith.constant 0 : index
      %c0_15 = arith.constant 0 : index
      %16 = vector.load %arg6[%c0_14, %c0_15] : memref<16x32xf32, #tpu.memory_space<vmem>>, vector<16x32xf32>
      %17 = arith.addf %15, %16 : vector<16x32xf32>
      %cst_16 = arith.constant dense<0.000000e+00> : vector<16xf32>
      %18 = vector.multi_reduction <add>, %17, %cst_16 [1] : vector<16x32xf32> to vector<16xf32>
      %19 = vector.shape_cast %18 : vector<16xf32> to vector<16x1xf32>
      %cst_17 = arith.constant 3.200000e+01 : f32
      %20 = vector.broadcast %cst_17 : f32 to vector<16x1xf32>
      %21 = arith.divf %19, %20 : vector<16x1xf32>
      %22 = vector.broadcast %21 : vector<16x1xf32> to vector<16x32xf32>
      %23 = arith.subf %17, %22 : vector<16x32xf32>
      %24 = arith.mulf %23, %23 : vector<16x32xf32>
      %cst_18 = arith.constant dense<0.000000e+00> : vector<16xf32>
      %25 = vector.multi_reduction <add>, %24, %cst_18 [1] : vector<16x32xf32> to vector<16xf32>
      %26 = vector.shape_cast %25 : vector<16xf32> to vector<16x1xf32>
      %cst_19 = arith.constant 3.200000e+01 : f32
      %27 = vector.broadcast %cst_19 : f32 to vector<16x1xf32>
      %28 = arith.divf %26, %27 : vector<16x1xf32>
      %29 = vector.broadcast %21 : vector<16x1xf32> to vector<16x32xf32>
      %30 = arith.subf %17, %29 : vector<16x32xf32>
      %cst_20 = arith.constant 9.99999974E-6 : f32
      %31 = vector.broadcast %cst_20 : f32 to vector<16x1xf32>
      %32 = arith.addf %28, %31 : vector<16x1xf32>
      %33 = math.rsqrt %32 : vector<16x1xf32>
      %34 = vector.broadcast %33 : vector<16x1xf32> to vector<16x32xf32>
      %35 = arith.mulf %30, %34 : vector<16x32xf32>
      %c0_21 = arith.constant 0 : index
      %c0_22 = arith.constant 0 : index
      %36 = vector.load %arg7[%c0_21, %c0_22] : memref<1x32xf32, #tpu.memory_space<vmem>>, vector<1x32xf32>
      %37 = vector.broadcast %36 : vector<1x32xf32> to vector<16x32xf32>
      %38 = arith.mulf %35, %37 : vector<16x32xf32>
      %c0_23 = arith.constant 0 : index
      %c0_24 = arith.constant 0 : index
      %39 = vector.load %arg8[%c0_23, %c0_24] : memref<1x32xf32, #tpu.memory_space<vmem>>, vector<1x32xf32>
      %40 = vector.broadcast %39 : vector<1x32xf32> to vector<16x32xf32>
      %41 = arith.addf %38, %40 : vector<16x32xf32>
      %c0_25 = arith.constant 0 : index
      %c0_26 = arith.constant 0 : index
      %42 = vector.load %arg9[%c0_25, %c0_26] : memref<16x32xf32, #tpu.memory_space<vmem>>, vector<16x32xf32>
      tpu.vector_store %arg9[%c0_25, %c0_26], %41 {strides = array<i32>} : memref<16x32xf32, #tpu.memory_space<vmem>>, vector<16x32xf32>,
    } else {
    }
    return
  }
  func.func @transform_0(%arg0: i32, %arg1: i32, %arg2: i32) -> (i32, i32) {
    %c0_i32 = arith.constant 0 : i32
    return %arg0, %arg2 : i32, i32
  }
  func.func @transform_1(%arg0: i32, %arg1: i32, %arg2: i32) -> (i32, i32) {
    %c0_i32 = arith.constant 0 : i32
    return %arg2, %arg1 : i32, i32
  }
  func.func @transform_2(%arg0: i32, %arg1: i32, %arg2: i32) -> (i32, i32) {
    %c0_i32 = arith.constant 0 : i32
    %c0_i32_0 = arith.constant 0 : i32
    return %c0_i32, %arg1 : i32, i32
  }
  func.func @transform_3(%arg0: i32, %arg1: i32, %arg2: i32) -> (i32, i32) {
    %c0_i32 = arith.constant 0 : i32
    return %arg0, %arg1 : i32, i32
  }
  func.func @transform_4(%arg0: i32, %arg1: i32, %arg2: i32) -> (i32, i32) {
    %c0_i32 = arith.constant 0 : i32
    %c0_i32_0 = arith.constant 0 : i32
    return %c0_i32, %arg1 : i32, i32
  }
  func.func @transform_5(%arg0: i32, %arg1: i32, %arg2: i32) -> (i32, i32) {
    %c0_i32 = arith.constant 0 : i32
    %c0_i32_0 = arith.constant 0 : i32
    return %c0_i32, %arg1 : i32, i32
  }
  func.func @transform_6(%arg0: i32, %arg1: i32, %arg2: i32) -> (i32, i32) {
    %c0_i32 = arith.constant 0 : i32
    return %arg0, %arg1 : i32, i32
  }
}

</mosaic_0001>

<llo_original>
// kernel: transformer_block_forward.5
$region0: #{transformer_block_forward.5}
  #allocation0 [shape = 'u32[]', space=smem, size = 0x4, offset = 0x4, fixed_abs, tag = 'smem constant byte address 0x4 - core index']
  #allocation1 [shape = 'u32[144,128]{1,0:T(1,128)}', space=vmem, size = 0x12000, scoped, tag = 'internal scratch']
  #allocation2 [shape = 'f32[16,96]{1,0:T(8,128)}', space=vmem, size = 0x2000, scoped, tag = 'scratch operand']
  %s0 = inlined_call_operand.vmem [shape: f32[16,32], index: 0, kind: input, shape index: {}]
  %s1 = inlined_call_operand.vmem [shape: bf16[32,96], index: 1, kind: input, shape index: {}]
  %s2 = inlined_call_operand.vmem [shape: bf16[16,96], index: 2, kind: output, shape index: {}]
  %s3 = sld [smem:[#allocation0]]
  $region26: #{transformer_block_forward.5} parent=0
    _
  %s5 = ssub.s32 1, %s3
  %s6 = scalar_select 0, %s5, %s3
  // Predicated region
  $region2: #{transformer_block_forward.5} parent=0 // pred_check
    _
  $region3: #{transformer_block_forward.5} parent=0 // pred_check_branch
    %8 = sbr.rel (0) target = $region5
  $region4: #{transformer_block_forward.5} parent=0 // pred_region
    _
  $region5: #{transformer_block_forward.5} parent=0 // pred_fallthru
    _
  // Predicated region
  $region6: #{transformer_block_forward.5} parent=0 // pred_check
    _
  $region7: #{transformer_block_forward.5} parent=0 // pred_check_branch
    %10 = sbr.rel (0) target = $region9
  $region8: #{transformer_block_forward.5} parent=0 // pred_region
    _
  $region9: #{transformer_block_forward.5} parent=0 // pred_fallthru
    _
  %p12 = scmp.eq.s32.totalorder 0, 0
  // Predicated region
  $region10: #{transformer_block_forward.5} parent=0 // pred_check
    %p13 = pneg %p12
  $region11: #{transformer_block_forward.5} parent=0 // pred_check_branch
    %15 = sbr.rel (%p13) target = $region13
  $region12: #{transformer_block_forward.5} parent=0 // pred_region
    %vm16 = vcmask 785408
    %17 = vst.msk [vmem:[#allocation2] sm:$0xff] %vm16, 0.0
    %18 = vst.msk [vmem:[#allocation2 + $0x8] sm:$0xff] %vm16, 0.0
  $region13: #{transformer_block_forward.5} parent=0 // pred_fallthru
    _
  %v19 = vld [vmem:[%s0] sm:$0xff]
  %v20 = vld [vmem:[%s0 + $0x8] sm:$0xff]
  %v21 = vpack.c.bf16 %v20, %v19
  %v22 = vld [vmem:[#allocation2] sm:$0xff]
  %v23 = vld [vmem:[#allocation2 + $0x8] sm:$0xff]
  %v24 = vld [vmem:[%s1] sm:$0xf]
  %v25 = vld [vmem:[%s1 + $0x4] sm:$0xf]
  %v26 = vld [vmem:[%s1 + $0x8] sm:$0xf]
  %v27 = vld [vmem:[%s1 + $0xc] sm:$0xf]
  %v32 = vunpack.c.l.b16 %v24
  %v33 = vunpack.c.l.b16 %v25
  %v34 = vunpack.c.l.b16 %v26
  %v35 = vunpack.c.l.b16 %v27
  %v36 = vpack.c.b16 %v33, %v32
  %v37 = vpack.c.b16 %v35, %v34
  %vm40 = vcmask 261120
  %v42 = vsel %vm40, %v21, 0
  %44 = vmatprep.subr.bf16.mxu0 0
  %45 = vmatpush1.bf16.msra.mxu0 %v36
  %46 = vmatprep.subr.bf16.mxu0 0
  %47 = vmatpush1.bf16.msra.mxu0 %v37
  %48 = vmatprep.subr.bf16.mxu0 0
  %49 = vmatpush1.bf16.msra.mxu0 0
  %50 = vmatprep.subr.bf16.mxu0 0
  %51 = vmatpush1.bf16.msra.mxu0 0
  %52 = vmatprep.subr.bf16.mxu0 0
  %53 = vmatpush1.bf16.msra.mxu0 0
  %54 = vmatprep.subr.bf16.mxu0 0
  %55 = vmatpush1.bf16.msra.mxu0 0
  %56 = vmatprep.subr.bf16.mxu0 0
  %57 = vmatpush1.bf16.msra.mxu0 0
  %58 = vmatprep.subr.bf16.mxu0 0
  %59 = vmatpush1.bf16.msra.mxu0 0
  %60 = vmatprep.subr.bf16.mxu0 0
  %61 = vmatpush1.bf16.msra.mxu0 0
  %62 = vmatprep.subr.bf16.mxu0 0
  %63 = vmatpush1.bf16.msra.mxu0 0
  %64 = vmatprep.subr.bf16.mxu0 0
  %65 = vmatpush1.bf16.msra.mxu0 0
  %66 = vmatprep.subr.bf16.mxu0 0
  %67 = vmatpush1.bf16.msra.mxu0 0
  %68 = vmatprep.subr.bf16.mxu0 0
  %69 = vmatpush1.bf16.msra.mxu0 0
  %70 = vmatprep.subr.bf16.mxu0 0
  %71 = vmatpush1.bf16.msra.mxu0 0
  %72 = vmatprep.subr.bf16.mxu0 0
  %73 = vmatpush1.bf16.msra.mxu0 0
  %74 = vmatprep.subr.bf16.mxu0 0
  %75 = vmatpush1.bf16.msra.mxu0 0
  %76 = vmatprep.mubr.bf16.mxu0 0
  %77 = vmatmul.mubr.bf16.gmra.mrb[0].mxu0 %v42
  %v78 = vpop.f32.mrb[0].mxu0
  %v79 = vadd.f32 0.0, %v78
  %v80 = vpop.f32.mrb[0].mxu0
  %v81 = vpop.f32.mrb[0].mxu0
  %v82 = vadd.f32 0.0, %v81
  %v83 = vpop.f32.mrb[0].mxu0
  %84 = vdwg.mxu0
  %v85 = vadd.f32 %v22, %v79
  %v86 = vadd.f32 %v23, %v82
  %vm87 = vcmask 785408
  %88 = vst.msk [vmem:[#allocation2] sm:$0xff] %vm87, %v85
  %89 = vst.msk [vmem:[#allocation2 + $0x8] sm:$0xff] %vm87, %v86
  // Predicated region
  $region14: #{transformer_block_forward.5} parent=0 // pred_check
    %p90 = pneg %p12
  $region15: #{transformer_block_forward.5} parent=0 // pred_check_branch
    %92 = sbr.rel (%p90) target = $region17
  $region16: #{transformer_block_forward.5} parent=0 // pred_region
    %v93 = vld [vmem:[#allocation2] sm:$0xff]
    %v94 = vld [vmem:[#allocation2 + $0x8] sm:$0xff]
    %v95 = vpack.c.bf16 %v94, %v93
    %v97 = vunpack.c.l.b16 %v95
    %v98 = vunpack.c.h.b16 %v95
    %v99 = vpack.c.b16 %v97, %v97
    %v100 = vpack.c.b16 %v98, %v98
    %vm103 = vcmask 781312
    %104 = vst.msk [vmem:[%s2] sm:$0xf] %vm103, %v99
    %105 = vst.msk [vmem:[%s2 + $0x4] sm:$0xf] %vm103, %v100
  $region17: #{transformer_block_forward.5} parent=0 // pred_fallthru
    _
  // Predicated region
  $region18: #{transformer_block_forward.5} parent=0 // pred_check
    _
  $region19: #{transformer_block_forward.5} parent=0 // pred_check_branch
    %107 = sbr.rel (0) target = $region21
  $region20: #{transformer_block_forward.5} parent=0 // pred_region
    _
  $region21: #{transformer_block_forward.5} parent=0 // pred_fallthru
    _
  // Predicated region
  $region22: #{transformer_block_forward.5} parent=0 // pred_check
    _
  $region23: #{transformer_block_forward.5} parent=0 // pred_check_branch
    %109 = sbr.rel (0) target = $region25
  $region24: #{transformer_block_forward.5} parent=0 // pred_region
    _
  $region25: #{transformer_block_forward.5} parent=0 // pred_fallthru
    _

// kernel: transformer_block_forward.8
$region0: #{transformer_block_forward.8}
  #allocation0 [shape = 'u32[]', space=smem, size = 0x4, offset = 0x4, fixed_abs, tag = 'smem constant byte address 0x4 - core index']
  #allocation1 [shape = 'u32[144,128]{1,0:T(1,128)}', space=vmem, size = 0x12000, scoped, tag = 'internal scratch']
  #allocation2 [shape = 'f32[16,128]{1,0:T(8,128)}', space=vmem, size = 0x2000, scoped, tag = 'scratch operand']
  %s0 = inlined_call_operand.vmem [shape: f32[16,32], index: 0, kind: input, shape index: {}]
  %s1 = inlined_call_operand.vmem [shape: bf16[32,128], index: 1, kind: input, shape index: {}]
  %s2 = inlined_call_operand.vmem [shape: f32[1,128], index: 2, kind: input, shape index: {}]
  %s3 = inlined_call_operand.vmem [shape: bf16[16,128], index: 3, kind: output, shape index: {}]
  %s4 = sld [smem:[#allocation0]]
  $region30: #{transformer_block_forward.8} parent=0
    _
  %s6 = ssub.s32 1, %s4
  %s7 = scalar_select 0, %s6, %s4
  // Predicated region
  $region2: #{transformer_block_forward.8} parent=0 // pred_check
    _
  $region3: #{transformer_block_forward.8} parent=0 // pred_check_branch
    %9 = sbr.rel (0) target = $region5
  $region4: #{transformer_block_forward.8} parent=0 // pred_region
    _
  $region5: #{transformer_block_forward.8} parent=0 // pred_fallthru
    _
  // Predicated region
  $region6: #{transformer_block_forward.8} parent=0 // pred_check
    _
  $region7: #{transformer_block_forward.8} parent=0 // pred_check_branch
    %11 = sbr.rel (0) target = $region9
  $region8: #{transformer_block_forward.8} parent=0 // pred_region
    _
  $region9: #{transformer_block_forward.8} parent=0 // pred_fallthru
    _
  // Predicated region
  $region10: #{transformer_block_forward.8} parent=0 // pred_check
    _
  $region11: #{transformer_block_forward.8} parent=0 // pred_check_branch
    %13 = sbr.rel (0) target = $region13
  $region12: #{transformer_block_forward.8} parent=0 // pred_region
    _
  $region13: #{transformer_block_forward.8} parent=0 // pred_fallthru
    _
  %p15 = scmp.eq.s32.totalorder 0, 0
  // Predicated region
  $region14: #{transformer_block_forward.8} parent=0 // pred_check
    %p16 = pneg %p15
  $region15: #{transformer_block_forward.8} parent=0 // pred_check_branch
    %18 = sbr.rel (%p16) target = $region17
  $region16: #{transformer_block_forward.8} parent=0 // pred_region
    %19 = vst [vmem:[#allocation2] sm:$0xff] 0.0
    %20 = vst [vmem:[#allocation2 + $0x8] sm:$0xff] 0.0
  $region17: #{transformer_block_forward.8} parent=0 // pred_fallthru
    _
  %v21 = vld [vmem:[%s0] sm:$0xff]
  %v22 = vld [vmem:[%s0 + $0x8] sm:$0xff]
  %v23 = vpack.c.bf16 %v22, %v21
  %v24 = vld [vmem:[#allocation2] sm:$0xff]
  %v25 = vld [vmem:[#allocation2 + $0x8] sm:$0xff]
  %v26 = vld [vmem:[%s1] sm:$0xf]
  %v27 = vld [vmem:[%s1 + $0x4] sm:$0xf]
  %v28 = vld [vmem:[%s1 + $0x8] sm:$0xf]
  %v29 = vld [vmem:[%s1 + $0xc] sm:$0xf]
  %v34 = vunpack.c.l.b16 %v26
  %v35 = vunpack.c.l.b16 %v27
  %v36 = vunpack.c.l.b16 %v28
  %v37 = vunpack.c.l.b16 %v29
  %v38 = vpack.c.b16 %v35, %v34
  %v39 = vpack.c.b16 %v37, %v36
  %vm42 = vcmask 261120
  %v44 = vsel %vm42, %v23, 0
  %46 = vmatprep.subr.bf16.mxu0 0
  %47 = vmatpush1.bf16.msra.mxu0 %v38
  %48 = vmatprep.subr.bf16.mxu0 0
  %49 = vmatpush1.bf16.msra.mxu0 %v39
  %50 = vmatprep.subr.bf16.mxu0 0
  %51 = vmatpush1.bf16.msra.mxu0 0
  %52 = vmatprep.subr.bf16.mxu0 0
  %53 = vmatpush1.bf16.msra.mxu0 0
  %54 = vmatprep.subr.bf16.mxu0 0
  %55 = vmatpush1.bf16.msra.mxu0 0
  %56 = vmatprep.subr.bf16.mxu0 0
  %57 = vmatpush1.bf16.msra.mxu0 0
  %58 = vmatprep.subr.bf16.mxu0 0
  %59 = vmatpush1.bf16.msra.mxu0 0
  %60 = vmatprep.subr.bf16.mxu0 0
  %61 = vmatpush1.bf16.msra.mxu0 0
  %62 = vmatprep.subr.bf16.mxu0 0
  %63 = vmatpush1.bf16.msra.mxu0 0
  %64 = vmatprep.subr.bf16.mxu0 0
  %65 = vmatpush1.bf16.msra.mxu0 0
  %66 = vmatprep.subr.bf16.mxu0 0
  %67 = vmatpush1.bf16.msra.mxu0 0
  %68 = vmatprep.subr.bf16.mxu0 0
  %69 = vmatpush1.bf16.msra.mxu0 0
  %70 = vmatprep.subr.bf16.mxu0 0
  %71 = vmatpush1.bf16.msra.mxu0 0
  %72 = vmatprep.subr.bf16.mxu0 0
  %73 = vmatpush1.bf16.msra.mxu0 0
  %74 = vmatprep.subr.bf16.mxu0 0
  %75 = vmatpush1.bf16.msra.mxu0 0
  %76 = vmatprep.subr.bf16.mxu0 0
  %77 = vmatpush1.bf16.msra.mxu0 0
  %78 = vmatprep.mubr.bf16.mxu0 0
  %79 = vmatmul.mubr.bf16.gmra.mrb[0].mxu0 %v44
  %v80 = vpop.f32.mrb[0].mxu0
  %v81 = vadd.f32 0.0, %v80
  %v82 = vpop.f32.mrb[0].mxu0
  %v83 = vpop.f32.mrb[0].mxu0
  %v84 = vadd.f32 0.0, %v83
  %v85 = vpop.f32.mrb[0].mxu0
  %86 = vdwg.mxu0
  %v87 = vadd.f32 %v24, %v81
  %v88 = vadd.f32 %v25, %v84
  %89 = vst [vmem:[#allocation2] sm:$0xff] %v87
  %90 = vst [vmem:[#allocation2 + $0x8] sm:$0xff] %v88
  // Predicated region
  $region18: #{transformer_block_forward.8} parent=0 // pred_check
    %p91 = pneg %p15
  $region19: #{transformer_block_forward.8} parent=0 // pred_check_branch
    %93 = sbr.rel (%p91) target = $region21
  $region20: #{transformer_block_forward.8} parent=0 // pred_region
    %v94 = vld [vmem:[#allocation2] sm:$0xff]
    %v95 = vld [vmem:[#allocation2 + $0x8] sm:$0xff]
    %v96 = vld [vmem:[%s2] sm:$0x1]
    %v98 = vlaneseq
    %v99 = vshrl.u32 %v98, 7
    %v100 = vsub.s32 0, %v99
    %v101 = vrot.slane %v96, %v100
    %v103 = vadd.f32 %v94, %v101
    %v104 = vadd.f32 %v95, %v101
    %v105 = vmax.f32 %v103, 0.0
    %v106 = vmax.f32 %v104, 0.0
    %v107 = vpack.c.bf16 %v106, %v105
    %v109 = vunpack.c.l.b16 %v107
    %v110 = vunpack.c.h.b16 %v107
    %v111 = vpack.c.b16 %v109, %v109
    %v112 = vpack.c.b16 %v110, %v110
    %115 = vst [vmem:[%s3] sm:$0xf] %v111
    %116 = vst [vmem:[%s3 + $0x4] sm:$0xf] %v112
  $region21: #{transformer_block_forward.8} parent=0 // pred_fallthru
    _
  // Predicated region
  $region22: #{transformer_block_forward.8} parent=0 // pred_check
    _
  $region23: #{transformer_block_forward.8} parent=0 // pred_check_branch
    %118 = sbr.rel (0) target = $region25
  $region24: #{transformer_block_forward.8} parent=0 // pred_region
    _
  $region25: #{transformer_block_forward.8} parent=0 // pred_fallthru
    _
  // Predicated region
  $region26: #{transformer_block_forward.8} parent=0 // pred_check
    _
  $region27: #{transformer_block_forward.8} parent=0 // pred_check_branch
    %120 = sbr.rel (0) target = $region29
  $region28: #{transformer_block_forward.8} parent=0 // pred_region
    _
  $region29: #{transformer_block_forward.8} parent=0 // pred_fallthru
    _

// kernel: transformer_block_forward.7
$region0: #{transformer_block_forward.7}
  #allocation0 [shape = 'u32[]', space=smem, size = 0x4, offset = 0x4, fixed_abs, tag = 'smem constant byte address 0x4 - core index']
  #allocation1 [shape = 'u32[144,128]{1,0:T(1,128)}', space=vmem, size = 0x12000, scoped, tag = 'internal scratch']
  #allocation2 [shape = 'f32[16,32]{1,0:T(8,128)}', space=vmem, size = 0x2000, scoped, tag = 'scratch operand']
  %s0 = inlined_call_operand.vmem [shape: bf16[16,32], index: 0, kind: input, shape index: {}]
  %s1 = inlined_call_operand.vmem [shape: bf16[32,32], index: 1, kind: input, shape index: {}]
  %s2 = inlined_call_operand.vmem [shape: f32[16,32], index: 2, kind: input, shape index: {}]
  %s3 = inlined_call_operand.vmem [shape: f32[1,32], index: 3, kind: input, shape index: {}]
  %s4 = inlined_call_operand.vmem [shape: f32[1,32], index: 4, kind: input, shape index: {}]
  %s5 = inlined_call_operand.vmem [shape: f32[16,32], index: 5, kind: output, shape index: {}]
  %s6 = sld [smem:[#allocation0]]
  $region38: #{transformer_block_forward.7} parent=0
    _
  %s8 = ssub.s32 1, %s6
  %s9 = scalar_select 0, %s8, %s6
  // Predicated region
  $region2: #{transformer_block_forward.7} parent=0 // pred_check
    _
  $region3: #{transformer_block_forward.7} parent=0 // pred_check_branch
    %11 = sbr.rel (0) target = $region5
  $region4: #{transformer_block_forward.7} parent=0 // pred_region
    _
  $region5: #{transformer_block_forward.7} parent=0 // pred_fallthru
    _
  // Predicated region
  $region6: #{transformer_block_forward.7} parent=0 // pred_check
    _
  $region7: #{transformer_block_forward.7} parent=0 // pred_check_branch
    %13 = sbr.rel (0) target = $region9
  $region8: #{transformer_block_forward.7} parent=0 // pred_region
    _
  $region9: #{transformer_block_forward.7} parent=0 // pred_fallthru
    _
  // Predicated region
  $region10: #{transformer_block_forward.7} parent=0 // pred_check
    _
  $region11: #{transformer_block_forward.7} parent=0 // pred_check_branch
    %15 = sbr.rel (0) target = $region13
  $region12: #{transformer_block_forward.7} parent=0 // pred_region
    _
  $region13: #{transformer_block_forward.7} parent=0 // pred_fallthru
    _
  // Predicated region
  $region14: #{transformer_block_forward.7} parent=0 // pred_check
    _
  $region15: #{transformer_block_forward.7} parent=0 // pred_check_branch
    %17 = sbr.rel (0) target = $region17
  $region16: #{transformer_block_forward.7} parent=0 // pred_region
    _
  $region17: #{transformer_block_forward.7} parent=0 // pred_fallthru
    _
  // Predicated region
  $region18: #{transformer_block_forward.7} parent=0 // pred_check
    _
  $region19: #{transformer_block_forward.7} parent=0 // pred_check_branch
    %19 = sbr.rel (0) target = $region21
  $region20: #{transformer_block_forward.7} parent=0 // pred_region
    _
  $region21: #{transformer_block_forward.7} parent=0 // pred_fallthru
    _
  %p21 = scmp.eq.s32.totalorder 0, 0
  // Predicated region
  $region22: #{transformer_block_forward.7} parent=0 // pred_check
    %p22 = pneg %p21
  $region23: #{transformer_block_forward.7} parent=0 // pred_check_branch
    %24 = sbr.rel (%p22) target = $region25
  $region24: #{transformer_block_forward.7} parent=0 // pred_region
    %vm25 = vcmask 261120
    %26 = vst.msk [vmem:[#allocation2] sm:$0xff] %vm25, 0.0
    %27 = vst.msk [vmem:[#allocation2 + $0x8] sm:$0xff] %vm25, 0.0
  $region25: #{transformer_block_forward.7} parent=0 // pred_fallthru
    _
  %v28 = vld [vmem:[%s0] sm:$0xf]
  %v29 = vld [vmem:[%s0 + $0x4] sm:$0xf]
  %v30 = vld [vmem:[#allocation2] sm:$0xff]
  %v31 = vld [vmem:[#allocation2 + $0x8] sm:$0xff]
  %v32 = vld [vmem:[%s1] sm:$0xf]
  %v33 = vld [vmem:[%s1 + $0x4] sm:$0xf]
  %v34 = vld [vmem:[%s1 + $0x8] sm:$0xf]
  %v35 = vld [vmem:[%s1 + $0xc] sm:$0xf]
  %v38 = vunpack.c.l.b16 %v28
  %v39 = vunpack.c.l.b16 %v29
  %v40 = vpack.c.b16 %v39, %v38
  %v45 = vunpack.c.l.b16 %v32
  %v46 = vunpack.c.l.b16 %v33
  %v47 = vunpack.c.l.b16 %v34
  %v48 = vunpack.c.l.b16 %v35
  %v49 = vpack.c.b16 %v46, %v45
  %v50 = vpack.c.b16 %v48, %v47
  %vm53 = vcmask 261120
  %v55 = vsel %vm53, %v40, 0
  %57 = vmatprep.subr.bf16.mxu0 0
  %58 = vmatpush1.bf16.msra.mxu0 %v49
  %59 = vmatprep.subr.bf16.mxu0 0
  %60 = vmatpush1.bf16.msra.mxu0 %v50
  %61 = vmatprep.subr.bf16.mxu0 0
  %62 = vmatpush1.bf16.msra.mxu0 0
  %63 = vmatprep.subr.bf16.mxu0 0
  %64 = vmatpush1.bf16.msra.mxu0 0
  %65 = vmatprep.subr.bf16.mxu0 0
  %66 = vmatpush1.bf16.msra.mxu0 0
  %67 = vmatprep.subr.bf16.mxu0 0
  %68 = vmatpush1.bf16.msra.mxu0 0
  %69 = vmatprep.subr.bf16.mxu0 0
  %70 = vmatpush1.bf16.msra.mxu0 0
  %71 = vmatprep.subr.bf16.mxu0 0
  %72 = vmatpush1.bf16.msra.mxu0 0
  %73 = vmatprep.subr.bf16.mxu0 0
  %74 = vmatpush1.bf16.msra.mxu0 0
  %75 = vmatprep.subr.bf16.mxu0 0
  %76 = vmatpush1.bf16.msra.mxu0 0
  %77 = vmatprep.subr.bf16.mxu0 0
  %78 = vmatpush1.bf16.msra.mxu0 0
  %79 = vmatprep.subr.bf16.mxu0 0
  %80 = vmatpush1.bf16.msra.mxu0 0
  %81 = vmatprep.subr.bf16.mxu0 0
  %82 = vmatpush1.bf16.msra.mxu0 0
  %83 = vmatprep.subr.bf16.mxu0 0
  %84 = vmatpush1.bf16.msra.mxu0 0
  %85 = vmatprep.subr.bf16.mxu0 0
  %86 = vmatpush1.bf16.msra.mxu0 0
  %87 = vmatprep.subr.bf16.mxu0 0
  %88 = vmatpush1.bf16.msra.mxu0 0
  %89 = vmatprep.mubr.bf16.mxu0 0
  %90 = vmatmul.mubr.bf16.gmra.mrb[0].mxu0 %v55
  %v91 = vpop.f32.mrb[0].mxu0
  %v92 = vadd.f32 0.0, %v91
  %v93 = vpop.f32.mrb[0].mxu0
  %v94 = vpop.f32.mrb[0].mxu0
  %v95 = vadd.f32 0.0, %v94
  %v96 = vpop.f32.mrb[0].mxu0
  %97 = vdwg.mxu0
  %v98 = vadd.f32 %v30, %v92
  %v99 = vadd.f32 %v31, %v95
  %100 = vst.msk [vmem:[#allocation2] sm:$0xff] %vm53, %v98
  %101 = vst.msk [vmem:[#allocation2 + $0x8] sm:$0xff] %vm53, %v99
  // Predicated region
  $region26: #{transformer_block_forward.7} parent=0 // pred_check
    %p102 = pneg %p21
  $region27: #{transformer_block_forward.7} parent=0 // pred_check_branch
    %104 = sbr.rel (%p102) target = $region29
  $region28: #{transformer_block_forward.7} parent=0 // pred_region
    %v105 = vld [vmem:[#allocation2] sm:$0xff]
    %v106 = vld [vmem:[#allocation2 + $0x8] sm:$0xff]
    %v107 = vld [vmem:[%s2] sm:$0xff]
    %v108 = vld [vmem:[%s2 + $0x8] sm:$0xff]
    %v109 = vadd.f32 %v105, %v107
    %v110 = vadd.f32 %v106, %v108
    %v111 = vsel %vm53, %v109, 0.0
    %112 = vadd.xlane.f32.xlu0 %v111
    %v113 = vpop.xlane.xlu0 %112
    %v114 = vsel %vm53, %v110, 0.0
    %115 = vadd.xlane.f32.xlu0 %v114
    %v116 = vpop.xlane.xlu0 %115
    %v117 = vrcp.pop 32.0
    %v118 = vmul.f32 %v113, %v117
    %v119 = vmul.f32 %v116, %v117
    %v120 = vsub.f32 %v109, %v118
    %v121 = vsub.f32 %v110, %v119
    %v122 = vmul.f32 %v120, %v120
    %v123 = vmul.f32 %v121, %v121
    %v124 = vsel %vm53, %v122, 0.0
    %125 = vadd.xlane.f32.xlu0 %v124
    %v126 = vpop.xlane.xlu0 %125
    %v127 = vsel %vm53, %v123, 0.0
    %128 = vadd.xlane.f32.xlu0 %v127
    %v129 = vpop.xlane.xlu0 %128
    %v130 = vmul.f32 %v126, %v117
    %v131 = vmul.f32 %v129, %v117
    %v132 = vadd.f32 %v130, 1e-05
    %v133 = vadd.f32 %v131, 1e-05
    %v134 = vrsqrt.pop %v132
    %v135 = vrsqrt.pop %v133
    %v136 = vmul.f32 %v120, %v134
    %v137 = vmul.f32 %v121, %v135
    %v138 = vld [vmem:[%s3] sm:$0x1]
    %v140 = vlaneseq
    %v141 = vshrl.u32 %v140, 7
    %v142 = vsub.s32 0, %v141
    %v143 = vrot.slane %v138, %v142
    %v145 = vmul.f32 %v136, %v143
    %v146 = vmul.f32 %v137, %v143
    %v147 = vld [vmem:[%s4] sm:$0x1]
    %v149 = vlaneseq
    %v150 = vshrl.u32 %v149, 7
    %v151 = vsub.s32 0, %v150
    %v152 = vrot.slane %v147, %v151
    %v154 = vadd.f32 %v145, %v152
    %v155 = vadd.f32 %v146, %v152
    %156 = vst.msk [vmem:[%s5] sm:$0xff] %vm53, %v154
    %157 = vst.msk [vmem:[%s5 + $0x8] sm:$0xff] %vm53, %v155
  $region29: #{transformer_block_forward.7} parent=0 // pred_fallthru
    _
  // Predicated region
  $region30: #{transformer_block_forward.7} parent=0 // pred_check
    _
  $region31: #{transformer_block_forward.7} parent=0 // pred_check_branch
    %159 = sbr.rel (0) target = $region33
  $region32: #{transformer_block_forward.7} parent=0 // pred_region
    _
  $region33: #{transformer_block_forward.7} parent=0 // pred_fallthru
    _
  // Predicated region
  $region34: #{transformer_block_forward.7} parent=0 // pred_check
    _
  $region35: #{transformer_block_forward.7} parent=0 // pred_check_branch
    %161 = sbr.rel (0) target = $region37
  $region36: #{transformer_block_forward.7} parent=0 // pred_region
    _
  $region37: #{transformer_block_forward.7} parent=0 // pred_fallthru
    _

// kernel: transformer_block_forward.6
$region0: #{transformer_block_forward.6}
  #allocation0 [shape = 'u32[]', space=smem, size = 0x4, offset = 0x4, fixed_abs, tag = 'smem constant byte address 0x4 - core index']
  #allocation1 [shape = 'u32[144,128]{1,0:T(1,128)}', space=vmem, size = 0x12000, scoped, tag = 'internal scratch']
  #allocation2 [shape = 'f32[1,8,1]{2,1,0:T(8,128)}', space=vmem, size = 0x1000, scoped, tag = 'scratch operand']
  #allocation3 [shape = 'f32[1,8,1]{2,1,0:T(8,128)}', space=vmem, size = 0x1000, scoped, tag = 'scratch operand']
  #allocation4 [shape = 'f32[1,8,8]{2,1,0:T(8,128)}', space=vmem, size = 0x1000, scoped, tag = 'scratch operand']
  %s0 = inlined_call_operand.vmem [shape: bf16[8,8,8], index: 0, kind: input, shape index: {}]
  %s1 = inlined_call_operand.vmem [shape: bf16[8,8,8], index: 1, kind: input, shape index: {}]
  %s2 = inlined_call_operand.vmem [shape: bf16[8,8,8], index: 2, kind: input, shape index: {}]
  %s3 = inlined_call_operand.vmem [shape: bf16[8,8,8], index: 3, kind: output, shape index: {}]
  %s4 = sld [smem:[#allocation0]]
  $region53: #{transformer_block_forward.6} parent=0
    _
  %s6 = ssub.s32 1, %s4
  %s7 = scalar_select 0, %s6, %s4
  loop: start=0, step=1, limit=10
  $region2: #{transformer_block_forward.6} parent=0 // loop_pre_header
    _
  $region3: #{transformer_block_forward.6} parent=0 // loop_header
    %s9 = sphi 0, %s13
    %p10 = scmp.ge.s32.totalorder %s9, 10
    %s16 = sphi 0, %s35
    %s17 = sphi 0, %s31
    %s18 = sphi 0, %s27
    %s19 = sphi 0, %s16
    %s20 = sphi 0, %s17
    %s21 = sphi 0, %s18
    %s22 = sphi 0, %s19
    %s23 = sphi 0, %s20
    %s24 = sphi 0, %s21
    %s40 = sphi 0, %s42
    %s43 = sphi 0, %s40
    %s44 = sphi 0, %s43
    %s60 = sphi 0, %s44
    %s68 = sphi 0, %s70
    %s71 = sphi 0, %s68
    %s72 = sphi 0, %s71
    %s88 = sphi 0, %s72
    %s96 = sphi 0, %s98
    %s99 = sphi 0, %s96
    %s100 = sphi 0, %s99
    %s116 = sphi 0, %s100
    %s124 = sphi 0, %s126
    %s127 = sphi 0, %s124
    %s128 = sphi 0, %s127
    %s144 = sphi 0, %s128
  $region4: #{transformer_block_forward.6} parent=0 // loop_header_branch
    %12 = sbr.rel (%p10) target = $region8
  $region5: #{transformer_block_forward.6} parent=0 // loop_body
    %s14 = ssub.s32 %s9, 1
    %s15 = ssub.s32 %s9, 2
    %s25 = sadd.s32 1, %s18
    %p26 = scmp.ge.s32.totalorder %s25, 1
    %s27 = scalar_select %p26, 0, %s25
    %s28 = sadd.s32 1, %s17
    %s29 = scalar_select %p26, %s28, %s17
    %p30 = scmp.ge.s32.totalorder %s29, 1
    %s31 = scalar_select %p30, 0, %s29
    %s32 = sadd.s32 1, %s16
    %s33 = scalar_select %p30, %s32, %s16
    %p34 = scmp.ge.s32.totalorder %s33, 8
    %s35 = scalar_select %p34, 0, %s33
    %s36 = ssub.s32 %s16, %s35
    %s37 = ssub.s32 %s17, %s31
    %s38 = sor.u32 %s36, %s37
    %p39 = scmp.eq.s32.totalorder %s38, 0
    %s41 = sadd.s32 %s40, 1
    %s42 = scalar_select %p39, %s40, %s41
    %p45 = pneg %p39
    %p46 = scmp.eq.s32.totalorder %s9, 7
    %p47 = por %p45, %p46
    %p48 = scmp.ne.s32.totalorder %s40, %s43
    %p49 = scmp.eq.s32.totalorder %s9, 0
    %p50 = por %p48, %p49
    %p51 = scmp.ne.s32.totalorder %s40, %s43
    %p52 = scmp.eq.s32.totalorder %s14, 7
    %p53 = por %p51, %p52
    %p54 = scmp.ne.s32.totalorder %s43, %s44
    %p55 = scmp.eq.s32.totalorder %s14, 0
    %p56 = por %p54, %p55
    %p57 = scmp.ne.s32.totalorder %s43, %s44
    %p58 = scmp.eq.s32.totalorder %s15, 7
    %p59 = por %p57, %p58
    %p61 = scmp.ne.s32.totalorder %s44, %s60
    %p62 = scmp.eq.s32.totalorder %s15, 0
    %p63 = por %p61, %p62
    %s64 = ssub.s32 %s16, %s35
    %s65 = ssub.s32 %s18, %s27
    %s66 = sor.u32 %s64, %s65
    %p67 = scmp.eq.s32.totalorder %s66, 0
    %s69 = sadd.s32 %s68, 1
    %s70 = scalar_select %p67, %s68, %s69
    %p73 = pneg %p67
    %p74 = scmp.eq.s32.totalorder %s9, 7
    %p75 = por %p73, %p74
    %p76 = scmp.ne.s32.totalorder %s68, %s71
    %p77 = scmp.eq.s32.totalorder %s9, 0
    %p78 = por %p76, %p77
    %p79 = scmp.ne.s32.totalorder %s68, %s71
    %p80 = scmp.eq.s32.totalorder %s14, 7
    %p81 = por %p79, %p80
    %p82 = scmp.ne.s32.totalorder %s71, %s72
    %p83 = scmp.eq.s32.totalorder %s14, 0
    %p84 = por %p82, %p83
    %p85 = scmp.ne.s32.totalorder %s71, %s72
    %p86 = scmp.eq.s32.totalorder %s15, 7
    %p87 = por %p85, %p86
    %p89 = scmp.ne.s32.totalorder %s72, %s88
    %p90 = scmp.eq.s32.totalorder %s15, 0
    %p91 = por %p89, %p90
    %s92 = ssub.s32 %s16, %s35
    %s93 = ssub.s32 %s18, %s27
    %s94 = sor.u32 %s92, %s93
    %p95 = scmp.eq.s32.totalorder %s94, 0
    %s97 = sadd.s32 %s96, 1
    %s98 = scalar_select %p95, %s96, %s97
    %p101 = pneg %p95
    %p102 = scmp.eq.s32.totalorder %s9, 7
    %p103 = por %p101, %p102
    %p104 = scmp.ne.s32.totalorder %s96, %s99
    %p105 = scmp.eq.s32.totalorder %s9, 0
    %p106 = por %p104, %p105
    %p107 = scmp.ne.s32.totalorder %s96, %s99
    %p108 = scmp.eq.s32.totalorder %s14, 7
    %p109 = por %p107, %p108
    %p110 = scmp.ne.s32.totalorder %s99, %s100
    %p111 = scmp.eq.s32.totalorder %s14, 0
    %p112 = por %p110, %p111
    %p113 = scmp.ne.s32.totalorder %s99, %s100
    %p114 = scmp.eq.s32.totalorder %s15, 7
    %p115 = por %p113, %p114
    %p117 = scmp.ne.s32.totalorder %s100, %s116
    %p118 = scmp.eq.s32.totalorder %s15, 0
    %p119 = por %p117, %p118
    %s120 = ssub.s32 %s16, %s35
    %s121 = ssub.s32 %s17, %s31
    %s122 = sor.u32 %s120, %s121
    %p123 = scmp.eq.s32.totalorder %s122, 0
    %s125 = sadd.s32 %s124, 1
    %s126 = scalar_select %p123, %s124, %s125
    %p129 = pneg %p123
    %p130 = scmp.eq.s32.totalorder %s9, 7
    %p131 = por %p129, %p130
    %p132 = scmp.ne.s32.totalorder %s124, %s127
    %p133 = scmp.eq.s32.totalorder %s9, 0
    %p134 = por %p132, %p133
    %p135 = scmp.ne.s32.totalorder %s124, %s127
    %p136 = scmp.eq.s32.totalorder %s14, 7
    %p137 = por %p135, %p136
    %p138 = scmp.ne.s32.totalorder %s127, %s128
    %p139 = scmp.eq.s32.totalorder %s14, 0
    %p140 = por %p138, %p139
    %p141 = scmp.ne.s32.totalorder %s127, %s128
    %p142 = scmp.eq.s32.totalorder %s15, 7
    %p143 = por %p141, %p142
    %p145 = scmp.ne.s32.totalorder %s128, %s144
    %p146 = scmp.eq.s32.totalorder %s15, 0
    %p147 = por %p145, %p146
    %p148 = scmp.le.s32.totalorder 1, %s9
    %p149 = scmp.lt.s32.totalorder %s9, 9
    %p150 = pnand %p148, %p149
    %p151 = pneg %p150
    // Predicated region
    $region9: #{transformer_block_forward.6} parent=5 // pred_check
      _
    $region10: #{transformer_block_forward.6} parent=5 // pred_check_branch
      %153 = sbr.rel (%p150) target = $region12
    $region11: #{transformer_block_forward.6} parent=5 // pred_region
      %s154 = ssub.s32 %s9, 1
    $region12: #{transformer_block_forward.6} parent=5 // pred_fallthru
      _
    %p155 = scmp.lt.s32.totalorder %s9, 8
    // Predicated region
    $region13: #{transformer_block_forward.6} parent=5 // pred_check
      %p156 = pneg %p155
    $region14: #{transformer_block_forward.6} parent=5 // pred_check_branch
      %158 = sbr.rel (%p156) target = $region16
    $region15: #{transformer_block_forward.6} parent=5 // pred_region
      // Predicated region
      $region17: #{transformer_block_forward.6} parent=15 // pred_check
        %p159 = pneg %p50
      $region18: #{transformer_block_forward.6} parent=15 // pred_check_branch
        %161 = sbr.rel (%p159) target = $region20
      $region19: #{transformer_block_forward.6} parent=15 // pred_region
        %p162 = scmp.lt.s32.totalorder %s16, 7
        %s163 = scalar_select %p162, %s16, 7
        %p164 = scmp.lt.s32.totalorder %s17, 0
        %s165 = scalar_select %p164, %s17, 0
        %s166 = sadd.s32 %s165, %s163
        %s167 = smul.addr %s166, 4
        %s168 = scalar_lea.vmem %s0, %s167
      $region20: #{transformer_block_forward.6} parent=15 // pred_fallthru
        _
      // Predicated region
      $region21: #{transformer_block_forward.6} parent=15 // pred_check
        %p169 = pneg %p78
      $region22: #{transformer_block_forward.6} parent=15 // pred_check_branch
        %171 = sbr.rel (%p169) target = $region24
      $region23: #{transformer_block_forward.6} parent=15 // pred_region
        %p172 = scmp.lt.s32.totalorder %s16, 7
        %s173 = scalar_select %p172, %s16, 7
        %p174 = scmp.lt.s32.totalorder %s18, 0
        %s175 = scalar_select %p174, %s18, 0
        %s176 = sadd.s32 %s175, %s173
        %s177 = smul.addr %s176, 4
        %s178 = scalar_lea.vmem %s1, %s177
      $region24: #{transformer_block_forward.6} parent=15 // pred_fallthru
        _
      // Predicated region
      $region25: #{transformer_block_forward.6} parent=15 // pred_check
        %p179 = pneg %p106
      $region26: #{transformer_block_forward.6} parent=15 // pred_check_branch
        %181 = sbr.rel (%p179) target = $region28
      $region27: #{transformer_block_forward.6} parent=15 // pred_region
        %p182 = scmp.lt.s32.totalorder %s16, 7
        %s183 = scalar_select %p182, %s16, 7
        %p184 = scmp.lt.s32.totalorder %s18, 0
        %s185 = scalar_select %p184, %s18, 0
        %s186 = sadd.s32 %s185, %s183
        %s187 = smul.addr %s186, 4
        %s188 = scalar_lea.vmem %s2, %s187
      $region28: #{transformer_block_forward.6} parent=15 // pred_fallthru
        _
    $region16: #{transformer_block_forward.6} parent=5 // pred_fallthru
      _
    %p189 = scmp.le.s32.totalorder 1, %s9
    %p190 = scmp.lt.s32.totalorder %s9, 9
    %p191 = pnand %p189, %p190
    %p192 = pneg %p191
    // Predicated region
    $region29: #{transformer_block_forward.6} parent=5 // pred_check
      _
    $region30: #{transformer_block_forward.6} parent=5 // pred_check_branch
      %194 = sbr.rel (%p191) target = $region32
    $region31: #{transformer_block_forward.6} parent=5 // pred_region
      %s195 = ssub.s32 %s9, 1
      %p196 = scmp.lt.s32.totalorder %s19, 7
      %s197 = scalar_select %p196, %s19, 7
      %p198 = scmp.lt.s32.totalorder %s20, 0
      %s199 = scalar_select %p198, %s20, 0
      %s200 = sadd.s32 %s199, %s197
      %s201 = smul.addr %s200, 4
      %s202 = scalar_lea.vmem %s0, %s201
      %p203 = pneg %p56
      %p204 = pneg %p53
      %p205 = scmp.lt.s32.totalorder %s19, 7
      %s206 = scalar_select %p205, %s19, 7
      %p207 = scmp.lt.s32.totalorder %s21, 0
      %s208 = scalar_select %p207, %s21, 0
      %s209 = sadd.s32 %s208, %s206
      %s210 = smul.addr %s209, 4
      %s211 = scalar_lea.vmem %s1, %s210
      %p212 = pneg %p84
      %p213 = pneg %p81
      %p214 = scmp.lt.s32.totalorder %s19, 7
      %s215 = scalar_select %p214, %s19, 7
      %p216 = scmp.lt.s32.totalorder %s21, 0
      %s217 = scalar_select %p216, %s21, 0
      %s218 = sadd.s32 %s217, %s215
      %s219 = smul.addr %s218, 4
      %s220 = scalar_lea.vmem %s2, %s219
      %p221 = pneg %p112
      %p222 = pneg %p109
      %p223 = pneg %p140
      %p224 = pneg %p137
      %p225 = scmp.lt.s32.totalorder %s19, 7
      %s226 = scalar_select %p225, %s19, 7
      %p227 = scmp.lt.s32.totalorder %s20, 0
      %s228 = scalar_select %p227, %s20, 0
      %s229 = sadd.s32 %s228, %s226
      %s230 = smul.addr %s229, 4
      %s231 = scalar_lea.vmem %s3, %s230
      %p232 = scmp.lt.s32.totalorder %s19, 7
      %s233 = scalar_select %p232, %s19, 7
      %p234 = scmp.lt.s32.totalorder %s20, 0
      %s235 = scalar_select %p234, %s20, 0
      %s236 = sadd.s32 %s235, %s233
      %s237 = smul.addr %s236, 4
      %s238 = scalar_lea.vmem %s0, %s237
      %p239 = scmp.lt.s32.totalorder %s19, 7
      %s240 = scalar_select %p239, %s19, 7
      %p241 = scmp.lt.s32.totalorder %s21, 0
      %s242 = scalar_select %p241, %s21, 0
      %s243 = sadd.s32 %s242, %s240
      %s244 = smul.addr %s243, 4
      %s245 = scalar_lea.vmem %s1, %s244
      %p246 = scmp.lt.s32.totalorder %s19, 7
      %s247 = scalar_select %p246, %s19, 7
      %p248 = scmp.lt.s32.totalorder %s21, 0
      %s249 = scalar_select %p248, %s21, 0
      %s250 = sadd.s32 %s249, %s247
      %s251 = smul.addr %s250, 4
      %s252 = scalar_lea.vmem %s2, %s251
      %p253 = scmp.lt.s32.totalorder %s19, 7
      %s254 = scalar_select %p253, %s19, 7
      %p255 = scmp.lt.s32.totalorder %s20, 0
      %s256 = scalar_select %p255, %s20, 0
      %s257 = sadd.s32 %s256, %s254
      %s258 = smul.addr %s257, 4
      %s259 = scalar_lea.vmem %s3, %s258
      %p261 = scmp.eq.s32.totalorder %s21, 0
      // Predicated region
      $region33: #{transformer_block_forward.6} parent=31 // pred_check
        %p262 = pneg %p261
      $region34: #{transformer_block_forward.6} parent=31 // pred_check_branch
        %264 = sbr.rel (%p262) target = $region36
      $region35: #{transformer_block_forward.6} parent=31 // pred_region
        %vm265 = vcmask 7168
        %266 = vst.msk [vmem:[#allocation2] sm:$0xff] %vm265, -inf
        %267 = vst.msk [vmem:[#allocation3] sm:$0xff] %vm265, 0.0
        %vm268 = vcmask 64512
        %269 = vst.msk [vmem:[#allocation4] sm:$0xff] %vm268, 0.0
      $region36: #{transformer_block_forward.6} parent=31 // pred_fallthru
        _
      %v270 = vld [vmem:[%s238] sm:$0xf]
      %v271 = vld [vmem:[%s245] sm:$0xf]
      %vm272 = vcmask 64512
      %v274 = vsel %vm272, %v270, 0
      %v277 = vsel %vm272, %v271, 0
      %279 = vmatprep.subr.bf16.mxu0 0
      %280 = vmatpush1.bf16.xpose.msra.mxu0 %v277
      %281 = vmatprep.subr.bf16.mxu0 0
      %282 = vmatpush1.bf16.xpose.msra.mxu0 0
      %283 = vmatprep.subr.bf16.mxu0 0
      %284 = vmatpush1.bf16.xpose.msra.mxu0 0
      %285 = vmatprep.subr.bf16.mxu0 0
      %286 = vmatpush1.bf16.xpose.msra.mxu0 0
      %287 = vmatprep.subr.bf16.mxu0 0
      %288 = vmatpush1.bf16.xpose.msra.mxu0 0
      %289 = vmatprep.subr.bf16.mxu0 0
      %290 = vmatpush1.bf16.xpose.msra.mxu0 0
      %291 = vmatprep.subr.bf16.mxu0 0
      %292 = vmatpush1.bf16.xpose.msra.mxu0 0
      %293 = vmatprep.subr.bf16.mxu0 0
      %294 = vmatpush1.bf16.xpose.msra.mxu0 0
      %295 = vmatprep.subr.bf16.mxu0 0
      %296 = vmatpush1.bf16.xpose.msra.mxu0 0
      %297 = vmatprep.subr.bf16.mxu0 0
      %298 = vmatpush1.bf16.xpose.msra.mxu0 0
      %299 = vmatprep.subr.bf16.mxu0 0
      %300 = vmatpush1.bf16.xpose.msra.mxu0 0
      %301 = vmatprep.subr.bf16.mxu0 0
      %302 = vmatpush1.bf16.xpose.msra.mxu0 0
      %303 = vmatprep.subr.bf16.mxu0 0
      %304 = vmatpush1.bf16.xpose.msra.mxu0 0
      %305 = vmatprep.subr.bf16.mxu0 0
      %306 = vmatpush1.bf16.xpose.msra.mxu0 0
      %307 = vmatprep.subr.bf16.mxu0 0
      %308 = vmatpush1.bf16.xpose.msra.mxu0 0
      %309 = vmatprep.subr.bf16.mxu0 0
      %310 = vmatpush1.bf16.xpose.msra.mxu0 0
      %311 = vmatprep.mubr.bf16.mxu0 0
      %312 = vmatmul.mubr.bf16.gmra.mrb[0].mxu0 %v274
      %v313 = vpop.f32.mrb[0].mxu0
      %v314 = vadd.f32 0.0, %v313
      %v315 = vpop.f32.mrb[0].mxu0
      %v316 = vpop.f32.mrb[0].mxu0
      %v317 = vpop.f32.mrb[0].mxu0
      %318 = vdwg.mxu0
      %v319 = vld [vmem:[#allocation2] sm:$0xff]
      %v320 = vsel %vm272, %v314, -inf
      %321 = vmax.xlane.f32.xlu0 %v320
      %v322 = vpop.xlane.xlu0 %321
      %v323 = vmax.f32 %v319, %v322
      %v324 = vsub.f32 %v319, %v323
      %v325 = vmul.f32 %v324, 1.442695
      %v326 = vpow.pop %v325
      %328 = vset.pattern.permute.xlu0 0
      %329 = vperm.xlu0 %328, %v323
      %v330 = vpop.permute.xlu0 %329
      %v332 = vsub.f32 %v314, %v330
      %v333 = vmul.f32 %v332, 1.442695
      %v334 = vpow.pop %v333
      %v335 = vld [vmem:[#allocation3] sm:$0xff]
      %v336 = vmul.f32 %v326, %v335
      %v337 = vsel %vm272, %v334, 0.0
      %338 = vadd.xlane.f32.xlu0 %v337
      %v339 = vpop.xlane.xlu0 %338
      %v340 = vadd.f32 %v336, %v339
      %vm341 = vcmask 7168
      %342 = vst.msk [vmem:[#allocation3] sm:$0xff] %vm341, %v340
      %v343 = vld [vmem:[#allocation4] sm:$0xff]
      %345 = vset.pattern.permute.xlu0 0
      %346 = vperm.xlu0 %345, %v326
      %v347 = vpop.permute.xlu0 %346
      %v349 = vmul.f32 %v347, %v343
      %v350 = vpack.c.bf16 %v334, %v334
      %v351 = vld [vmem:[%s252] sm:$0xf]
      %v353 = vsel %vm272, %v350, 0
      %vm355 = vcmask 1043456
      %v357 = vsel %vm355, %v351, 0
      %359 = vmatprep.subr.bf16.mxu0 0
      %360 = vmatpush1.bf16.msra.mxu0 %v357
      %361 = vmatprep.subr.bf16.mxu0 0
      %362 = vmatpush1.bf16.msra.mxu0 0
      %363 = vmatprep.subr.bf16.mxu0 0
      %364 = vmatpush1.bf16.msra.mxu0 0
      %365 = vmatprep.subr.bf16.mxu0 0
      %366 = vmatpush1.bf16.msra.mxu0 0
      %367 = vmatprep.subr.bf16.mxu0 0
      %368 = vmatpush1.bf16.msra.mxu0 0
      %369 = vmatprep.subr.bf16.mxu0 0
      %370 = vmatpush1.bf16.msra.mxu0 0
      %371 = vmatprep.subr.bf16.mxu0 0
      %372 = vmatpush1.bf16.msra.mxu0 0
      %373 = vmatprep.subr.bf16.mxu0 0
      %374 = vmatpush1.bf16.msra.mxu0 0
      %375 = vmatprep.subr.bf16.mxu0 0
      %376 = vmatpush1.bf16.msra.mxu0 0
      %377 = vmatprep.subr.bf16.mxu0 0
      %378 = vmatpush1.bf16.msra.mxu0 0
      %379 = vmatprep.subr.bf16.mxu0 0
      %380 = vmatpush1.bf16.msra.mxu0 0
      %381 = vmatprep.subr.bf16.mxu0 0
      %382 = vmatpush1.bf16.msra.mxu0 0
      %383 = vmatprep.subr.bf16.mxu0 0
      %384 = vmatpush1.bf16.msra.mxu0 0
      %385 = vmatprep.subr.bf16.mxu0 0
      %386 = vmatpush1.bf16.msra.mxu0 0
      %387 = vmatprep.subr.bf16.mxu0 0
      %388 = vmatpush1.bf16.msra.mxu0 0
      %389 = vmatprep.subr.bf16.mxu0 0
      %390 = vmatpush1.bf16.msra.mxu0 0
      %391 = vmatprep.mubr.bf16.mxu0 0
      %392 = vmatmul.mubr.bf16.gmra.mrb[0].mxu0 %v353
      %v393 = vpop.f32.mrb[0].mxu0
      %v394 = vadd.f32 0.0, %v393
      %v395 = vpop.f32.mrb[0].mxu0
      %v396 = vpop.f32.mrb[0].mxu0
      %v397 = vpop.f32.mrb[0].mxu0
      %398 = vdwg.mxu0
      %v399 = vadd.f32 %v349, %v394
      %400 = vst.msk [vmem:[#allocation4] sm:$0xff] %vm272, %v399
      %401 = vst.msk [vmem:[#allocation2] sm:$0xff] %vm341, %v323
      // Predicated region
      $region37: #{transformer_block_forward.6} parent=31 // pred_check
        %p402 = pneg %p261
      $region38: #{transformer_block_forward.6} parent=31 // pred_check_branch
        %404 = sbr.rel (%p402) target = $region40
      $region39: #{transformer_block_forward.6} parent=31 // pred_region
        %v405 = vld [vmem:[#allocation4] sm:$0xff]
        %v406 = vld [vmem:[#allocation3] sm:$0xff]
        %v407 = vrcp.pop %v406
        %409 = vset.pattern.permute.xlu0 0
        %410 = vperm.xlu0 %409, %v407
        %v411 = vpop.permute.xlu0 %410
        %v413 = vmul.f32 %v405, %v411
        %v414 = vpack.c.bf16 %v413, %v413
        %vm415 = vcmask 60416
        %416 = vst.msk [vmem:[%s259] sm:$0xf] %vm415, %v414
      $region40: #{transformer_block_forward.6} parent=31 // pred_fallthru
        _
      %p417 = scmp.lt.s32.totalorder %s19, 7
      %s418 = scalar_select %p417, %s19, 7
      %p419 = scmp.lt.s32.totalorder %s20, 0
      %s420 = scalar_select %p419, %s20, 0
      %s421 = sadd.s32 %s420, %s418
      %s422 = smul.addr %s421, 4
      %s423 = scalar_lea.vmem %s3, %s422
      // Predicated region
      $region41: #{transformer_block_forward.6} parent=31 // pred_check
        %p424 = pneg %p137
      $region42: #{transformer_block_forward.6} parent=31 // pred_check_branch
        %426 = sbr.rel (%p424) target = $region44
      $region43: #{transformer_block_forward.6} parent=31 // pred_region
        _
      $region44: #{transformer_block_forward.6} parent=31 // pred_fallthru
        _
    $region32: #{transformer_block_forward.6} parent=5 // pred_fallthru
      _
    %p427 = scmp.le.s32.totalorder 2, %s9
    // Predicated region
    $region45: #{transformer_block_forward.6} parent=5 // pred_check
      %p428 = pneg %p427
    $region46: #{transformer_block_forward.6} parent=5 // pred_check_branch
      %430 = sbr.rel (%p428) target = $region48
    $region47: #{transformer_block_forward.6} parent=5 // pred_region
      %s431 = ssub.s32 %s9, 2
      // Predicated region
      $region49: #{transformer_block_forward.6} parent=47 // pred_check
        %p432 = pneg %p143
      $region50: #{transformer_block_forward.6} parent=47 // pred_check_branch
        %434 = sbr.rel (%p432) target = $region52
      $region51: #{transformer_block_forward.6} parent=47 // pred_region
        %p435 = scmp.lt.s32.totalorder %s22, 7
        %s436 = scalar_select %p435, %s22, 7
        %p437 = scmp.lt.s32.totalorder %s23, 0
        %s438 = scalar_select %p437, %s23, 0
        %s439 = sadd.s32 %s438, %s436
        %s440 = smul.addr %s439, 4
        %s441 = scalar_lea.vmem %s3, %s440
      $region52: #{transformer_block_forward.6} parent=47 // pred_fallthru
        _
    $region48: #{transformer_block_forward.6} parent=5 // pred_fallthru
      _
  $region6: #{transformer_block_forward.6} parent=0 // loop_footer
    %s13 = sadd.s32 1, %s9
  $region7: #{transformer_block_forward.6} parent=0 // loop_footer_branch
    %8 = sbr.rel target = $region3
  $region8: #{transformer_block_forward.6} parent=0 // loop_exit
    _

// kernel: transformer_block_forward.9
$region0: #{transformer_block_forward.9}
  #allocation0 [shape = 'u32[]', space=smem, size = 0x4, offset = 0x4, fixed_abs, tag = 'smem constant byte address 0x4 - core index']
  #allocation1 [shape = 'u32[144,128]{1,0:T(1,128)}', space=vmem, size = 0x12000, scoped, tag = 'internal scratch']
  #allocation2 [shape = 'f32[16,32]{1,0:T(8,128)}', space=vmem, size = 0x2000, scoped, tag = 'scratch operand']
  %s0 = inlined_call_operand.vmem [shape: bf16[16,128], index: 0, kind: input, shape index: {}]
  %s1 = inlined_call_operand.vmem [shape: bf16[128,32], index: 1, kind: input, shape index: {}]
  %s2 = inlined_call_operand.vmem [shape: f32[1,32], index: 2, kind: input, shape index: {}]
  %s3 = inlined_call_operand.vmem [shape: f32[16,32], index: 3, kind: input, shape index: {}]
  %s4 = inlined_call_operand.vmem [shape: f32[1,32], index: 4, kind: input, shape index: {}]
  %s5 = inlined_call_operand.vmem [shape: f32[1,32], index: 5, kind: input, shape index: {}]
  %s6 = inlined_call_operand.hbm [shape: f32[16,32], index: 6, kind: output, shape index: {}]
  %s7 = sld [smem:[#allocation0]]
  $region42: #{transformer_block_forward.9} parent=0
    _
  %s9 = ssub.s32 1, %s7
  %s10 = scalar_select 0, %s9, %s7
  $region1: #{transformer_block_forward.9} parent=0
    #allocation3 [shape = 'u8[8192]{0}', space=vmem, size = 0x2000, scoped, tag = 'output window, operand 0, single buffered']
    #allocation4 [shape = 's32[1]{0}', space=sflag, size = 0x4, scoped, tag = 'scoped memory for transformer_block_forward.9']
    %11 = vsyncpa [#allocation4], 0
    // Predicated region
    $region2: #{transformer_block_forward.9} parent=1 // pred_check
      _
    $region3: #{transformer_block_forward.9} parent=1 // pred_check_branch
      %13 = sbr.rel (0) target = $region5
    $region4: #{transformer_block_forward.9} parent=1 // pred_region
      _
    $region5: #{transformer_block_forward.9} parent=1 // pred_fallthru
      _
    // Predicated region
    $region6: #{transformer_block_forward.9} parent=1 // pred_check
      _
    $region7: #{transformer_block_forward.9} parent=1 // pred_check_branch
      %15 = sbr.rel (0) target = $region9
    $region8: #{transformer_block_forward.9} parent=1 // pred_region
      _
    $region9: #{transformer_block_forward.9} parent=1 // pred_fallthru
      _
    // Predicated region
    $region10: #{transformer_block_forward.9} parent=1 // pred_check
      _
    $region11: #{transformer_block_forward.9} parent=1 // pred_check_branch
      %17 = sbr.rel (0) target = $region13
    $region12: #{transformer_block_forward.9} parent=1 // pred_region
      _
    $region13: #{transformer_block_forward.9} parent=1 // pred_fallthru
      _
    // Predicated region
    $region14: #{transformer_block_forward.9} parent=1 // pred_check
      _
    $region15: #{transformer_block_forward.9} parent=1 // pred_check_branch
      %19 = sbr.rel (0) target = $region17
    $region16: #{transformer_block_forward.9} parent=1 // pred_region
      _
    $region17: #{transformer_block_forward.9} parent=1 // pred_fallthru
      _
    // Predicated region
    $region18: #{transformer_block_forward.9} parent=1 // pred_check
      _
    $region19: #{transformer_block_forward.9} parent=1 // pred_check_branch
      %21 = sbr.rel (0) target = $region21
    $region20: #{transformer_block_forward.9} parent=1 // pred_region
      _
    $region21: #{transformer_block_forward.9} parent=1 // pred_fallthru
      _
    // Predicated region
    $region22: #{transformer_block_forward.9} parent=1 // pred_check
      _
    $region23: #{transformer_block_forward.9} parent=1 // pred_check_branch
      %23 = sbr.rel (0) target = $region25
    $region24: #{transformer_block_forward.9} parent=1 // pred_region
      _
    $region25: #{transformer_block_forward.9} parent=1 // pred_fallthru
      _
    %p25 = scmp.eq.s32.totalorder 0, 0
    // Predicated region
    $region26: #{transformer_block_forward.9} parent=1 // pred_check
      %p26 = pneg %p25
    $region27: #{transformer_block_forward.9} parent=1 // pred_check_branch
      %28 = sbr.rel (%p26) target = $region29
    $region28: #{transformer_block_forward.9} parent=1 // pred_region
      %vm29 = vcmask 261120
      %30 = vst.msk [vmem:[#allocation2] sm:$0xff] %vm29, 0.0
      %31 = vst.msk [vmem:[#allocation2 + $0x8] sm:$0xff] %vm29, 0.0
    $region29: #{transformer_block_forward.9} parent=1 // pred_fallthru
      _
    %v32 = vld [vmem:[%s0] sm:$0xf]
    %v33 = vld [vmem:[%s0 + $0x4] sm:$0xf]
    %v34 = vld [vmem:[#allocation2] sm:$0xff]
    %v35 = vld [vmem:[#allocation2 + $0x8] sm:$0xff]
    %v36 = vld [vmem:[%s1] sm:$0xf]
    %v37 = vld [vmem:[%s1 + $0x4] sm:$0xf]
    %v38 = vld [vmem:[%s1 + $0x8] sm:$0xf]
    %v39 = vld [vmem:[%s1 + $0xc] sm:$0xf]
    %v40 = vld [vmem:[%s1 + $0x10] sm:$0xf]
    %v41 = vld [vmem:[%s1 + $0x14] sm:$0xf]
    %v42 = vld [vmem:[%s1 + $0x18] sm:$0xf]
    %v43 = vld [vmem:[%s1 + $0x1c] sm:$0xf]
    %v44 = vld [vmem:[%s1 + $0x20] sm:$0xf]
    %v45 = vld [vmem:[%s1 + $0x24] sm:$0xf]
    %v46 = vld [vmem:[%s1 + $0x28] sm:$0xf]
    %v47 = vld [vmem:[%s1 + $0x2c] sm:$0xf]
    %v48 = vld [vmem:[%s1 + $0x30] sm:$0xf]
    %v49 = vld [vmem:[%s1 + $0x34] sm:$0xf]
    %v50 = vld [vmem:[%s1 + $0x38] sm:$0xf]
    %v51 = vld [vmem:[%s1 + $0x3c] sm:$0xf]
    %v54 = vunpack.c.l.b16 %v32
    %v55 = vunpack.c.l.b16 %v33
    %v56 = vpack.c.b16 %v55, %v54
    %v74 = vunpack.c.l.b16 %v36
    %v75 = vunpack.c.l.b16 %v37
    %v76 = vunpack.c.l.b16 %v38
    %v77 = vunpack.c.l.b16 %v39
    %v78 = vunpack.c.l.b16 %v40
    %v79 = vunpack.c.l.b16 %v41
    %v80 = vunpack.c.l.b16 %v42
    %v81 = vunpack.c.l.b16 %v43
    %v82 = vunpack.c.l.b16 %v44
    %v83 = vunpack.c.l.b16 %v45
    %v84 = vunpack.c.l.b16 %v46
    %v85 = vunpack.c.l.b16 %v47
    %v86 = vunpack.c.l.b16 %v48
    %v87 = vunpack.c.l.b16 %v49
    %v88 = vunpack.c.l.b16 %v50
    %v89 = vunpack.c.l.b16 %v51
    %v90 = vpack.c.b16 %v75, %v74
    %v91 = vpack.c.b16 %v77, %v76
    %v92 = vpack.c.b16 %v79, %v78
    %v93 = vpack.c.b16 %v81, %v80
    %v94 = vpack.c.b16 %v83, %v82
    %v95 = vpack.c.b16 %v85, %v84
    %v96 = vpack.c.b16 %v87, %v86
    %v97 = vpack.c.b16 %v89, %v88
    %106 = vmatprep.subr.bf16.mxu0 0
    %107 = vmatpush1.bf16.msra.mxu0 %v90
    %108 = vmatprep.subr.bf16.mxu0 0
    %109 = vmatpush1.bf16.msra.mxu0 %v91
    %110 = vmatprep.subr.bf16.mxu0 0
    %111 = vmatpush1.bf16.msra.mxu0 %v92
    %112 = vmatprep.subr.bf16.mxu0 0
    %113 = vmatpush1.bf16.msra.mxu0 %v93
    %114 = vmatprep.subr.bf16.mxu0 0
    %115 = vmatpush1.bf16.msra.mxu0 %v94
    %116 = vmatprep.subr.bf16.mxu0 0
    %117 = vmatpush1.bf16.msra.mxu0 %v95
    %118 = vmatprep.subr.bf16.mxu0 0
    %119 = vmatpush1.bf16.msra.mxu0 %v96
    %120 = vmatprep.subr.bf16.mxu0 0
    %121 = vmatpush1.bf16.msra.mxu0 %v97
    %122 = vmatprep.subr.bf16.mxu0 0
    %123 = vmatpush1.bf16.msra.mxu0 0
    %124 = vmatprep.subr.bf16.mxu0 0
    %125 = vmatpush1.bf16.msra.mxu0 0
    %126 = vmatprep.subr.bf16.mxu0 0
    %127 = vmatpush1.bf16.msra.mxu0 0
    %128 = vmatprep.subr.bf16.mxu0 0
    %129 = vmatpush1.bf16.msra.mxu0 0
    %130 = vmatprep.subr.bf16.mxu0 0
    %131 = vmatpush1.bf16.msra.mxu0 0
    %132 = vmatprep.subr.bf16.mxu0 0
    %133 = vmatpush1.bf16.msra.mxu0 0
    %134 = vmatprep.subr.bf16.mxu0 0
    %135 = vmatpush1.bf16.msra.mxu0 0
    %136 = vmatprep.subr.bf16.mxu0 0
    %137 = vmatpush1.bf16.msra.mxu0 0
    %138 = vmatprep.mubr.bf16.mxu0 0
    %139 = vmatmul.mubr.bf16.gmra.mrb[0].mxu0 %v56
    %v140 = vpop.f32.mrb[0].mxu0
    %v141 = vadd.f32 0.0, %v140
    %v142 = vpop.f32.mrb[0].mxu0
    %v143 = vpop.f32.mrb[0].mxu0
    %v144 = vadd.f32 0.0, %v143
    %v145 = vpop.f32.mrb[0].mxu0
    %146 = vdwg.mxu0
    %v147 = vadd.f32 %v34, %v141
    %v148 = vadd.f32 %v35, %v144
    %vm149 = vcmask 261120
    %150 = vst.msk [vmem:[#allocation2] sm:$0xff] %vm149, %v147
    %151 = vst.msk [vmem:[#allocation2 + $0x8] sm:$0xff] %vm149, %v148
    // Predicated region
    $region30: #{transformer_block_forward.9} parent=1 // pred_check
      %p152 = pneg %p25
    $region31: #{transformer_block_forward.9} parent=1 // pred_check_branch
      %154 = sbr.rel (%p152) target = $region33
    $region32: #{transformer_block_forward.9} parent=1 // pred_region
      %v155 = vld [vmem:[#allocation2] sm:$0xff]
      %v156 = vld [vmem:[#allocation2 + $0x8] sm:$0xff]
      %v157 = vld [vmem:[%s2] sm:$0x1]
      %v159 = vlaneseq
      %v160 = vshrl.u32 %v159, 7
      %v161 = vsub.s32 0, %v160
      %v162 = vrot.slane %v157, %v161
      %v164 = vadd.f32 %v155, %v162
      %v165 = vadd.f32 %v156, %v162
      %v166 = vld [vmem:[%s3] sm:$0xff]
      %v167 = vld [vmem:[%s3 + $0x8] sm:$0xff]
      %v168 = vadd.f32 %v164, %v166
      %v169 = vadd.f32 %v165, %v167
      %v170 = vsel %vm149, %v168, 0.0
      %171 = vadd.xlane.f32.xlu0 %v170
      %v172 = vpop.xlane.xlu0 %171
      %v173 = vsel %vm149, %v169, 0.0
      %174 = vadd.xlane.f32.xlu0 %v173
      %v175 = vpop.xlane.xlu0 %174
      %v176 = vrcp.pop 32.0
      %v177 = vmul.f32 %v172, %v176
      %v178 = vmul.f32 %v175, %v176
      %v179 = vsub.f32 %v168, %v177
      %v180 = vsub.f32 %v169, %v178
      %v181 = vmul.f32 %v179, %v179
      %v182 = vmul.f32 %v180, %v180
      %v183 = vsel %vm149, %v181, 0.0
      %184 = vadd.xlane.f32.xlu0 %v183
      %v185 = vpop.xlane.xlu0 %184
      %v186 = vsel %vm149, %v182, 0.0
      %187 = vadd.xlane.f32.xlu0 %v186
      %v188 = vpop.xlane.xlu0 %187
      %v189 = vmul.f32 %v185, %v176
      %v190 = vmul.f32 %v188, %v176
      %v191 = vadd.f32 %v189, 1e-05
      %v192 = vadd.f32 %v190, 1e-05
      %v193 = vrsqrt.pop %v191
      %v194 = vrsqrt.pop %v192
      %v195 = vmul.f32 %v179, %v193
      %v196 = vmul.f32 %v180, %v194
      %v197 = vld [vmem:[%s4] sm:$0x1]
      %v199 = vlaneseq
      %v200 = vshrl.u32 %v199, 7
      %v201 = vsub.s32 0, %v200
      %v202 = vrot.slane %v197, %v201
      %v204 = vmul.f32 %v195, %v202
      %v205 = vmul.f32 %v196, %v202
      %v206 = vld [vmem:[%s5] sm:$0x1]
      %v208 = vlaneseq
      %v209 = vshrl.u32 %v208, 7
      %v210 = vsub.s32 0, %v209
      %v211 = vrot.slane %v206, %v210
      %v213 = vadd.f32 %v204, %v211
      %v214 = vadd.f32 %v205, %v211
      %215 = vst.msk [vmem:[#allocation3] sm:$0xff] %vm149, %v213
      %216 = vst.msk [vmem:[#allocation3 + $0x8] sm:$0xff] %vm149, %v214
    $region33: #{transformer_block_forward.9} parent=1 // pred_fallthru
      _
    // Predicated region
    $region34: #{transformer_block_forward.9} parent=1 // pred_check
      _
    $region35: #{transformer_block_forward.9} parent=1 // pred_check_branch
      %218 = sbr.rel (0) target = $region37
    $region36: #{transformer_block_forward.9} parent=1 // pred_region
      %s220 = ssub.s32 256, 256
      %221 = vsyncadd [#allocation4], %s220
      %s222 = sshll.u32 [#allocation3], 4
      %s223 = int_to_ptr.vmem [resolvable:$true] %s222
      %228 = dma.vmem_to_hbm [thread:$0]  %s223, 256, %s6, [#allocation4], 128, 128, 8
    $region37: #{transformer_block_forward.9} parent=1 // pred_fallthru
      _
    // Predicated region
    $region38: #{transformer_block_forward.9} parent=1 // pred_check
      _
    $region39: #{transformer_block_forward.9} parent=1 // pred_check_branch
      %230 = sbr.rel (0) target = $region41
    $region40: #{transformer_block_forward.9} parent=1 // pred_region
      %231 = dma.done [#allocation4], 256
    $region41: #{transformer_block_forward.9} parent=1 // pred_fallthru
      _
    %232 = vsyncpa [#allocation4], 1

</llo_original>
